<compile_context>
chip_gen: v7x
topology: tpu7x:2x2x1
jax: 0.10.0
libtpu: 0.0.40
codegen_flags: <defaults>
</compile_context>

<pallas_src>
import functools

import jax
import jax.numpy as jnp
from jax.experimental import pallas as pl
from jax.experimental.pallas import tpu as pltpu


_LANE = 128
_SUB = 16  # bf16 sublane packing quantum -> keep batch tiles 16-row aligned


def _round_up(x, m):
    return ((x + m - 1) // m) * m


def _red_kernel(h8p, hp, dp, bf16_act,
                x_ref, w1_ref, pw23_ref, tw234_ref, b_ref, out_ref):
    """Fused predictor + target towers.

    All hidden/output widths are padded to 128-lane multiples, so every slice
    below is lane-aligned (no masked loads/stores, no relayouts).
    """
    ht = h8p + hp                  # fused first-layer output width
    o_pb2 = ht                     # bias-slab offsets (all 128-multiples)
    o_pb3 = o_pb2 + hp
    o_tb2 = o_pb3 + dp
    o_tb3 = o_tb2 + h8p
    o_tb4 = o_tb3 + h8p

    def act(z):
        # tanh runs on the EUP; bf16 path (~2x rate) on v6e/v7x, f32 on v5e.
        if bf16_act:
            return jnp.tanh(z.astype(jnp.bfloat16))
        return jnp.tanh(z).astype(jnp.bfloat16)

    x = x_ref[...]                                    # (TILE_B, D) bf16

    # ---- fused first layer of BOTH towers: columns = [target | predictor] ----
    hg = act(jnp.dot(x, w1_ref[...], preferred_element_type=jnp.float32)
             + b_ref[:, :ht])
    g = hg[:, :h8p]                                   # target hidden
    h = hg[:, h8p:]                                   # predictor hidden

    # ---- predictor: (Linear+Tanh above) -> Linear+Tanh -> Linear ----
    h = act(jnp.dot(h, pw23_ref[:, :hp], preferred_element_type=jnp.float32)
            + b_ref[:, o_pb2:o_pb2 + hp])
    pred = (jnp.dot(h, pw23_ref[:, hp:], preferred_element_type=jnp.float32)
            + b_ref[:, o_pb3:o_pb3 + dp])

    # ---- target: (Linear+Tanh above) -> [Dropout=id] -> Linear+Tanh ->
    #              [Dropout=id] -> Linear+Tanh -> Linear ----
    g = act(jnp.dot(g, tw234_ref[:, :h8p], preferred_element_type=jnp.float32)
            + b_ref[:, o_tb2:o_tb2 + h8p])
    g = act(jnp.dot(g, tw234_ref[:, h8p:2 * h8p],
                    preferred_element_type=jnp.float32)
            + b_ref[:, o_tb3:o_tb3 + h8p])
    targ = (jnp.dot(g, tw234_ref[:, 2 * h8p:], preferred_element_type=jnp.float32)
            + b_ref[:, o_tb4:o_tb4 + dp])

    # lane-dense combined output slab: [pred_pad | targ_pad]
    out_ref[:, :dp] = pred
    out_ref[:, dp:] = targ


def red_discriminator_forward(state, action, params, *, tile_b_max=None):
    """Forward pass of REDDiscriminator (state_only=False).

    params: 7 (W, b) pairs with W already in (in_features, out_features) layout:
        [predictor L1, L2, L3, target L1, L2, L3, L4].
    Returns (prediction, target), each (B, state_size + action_size) float32.
    """
    (pw1, pb1), (pw2, pb2), (pw3, pb3), \
        (tw1, tb1), (tw2, tb2), (tw3, tb3), (tw4, tb4) = params

    B, S = state.shape
    A = action.shape[1]
    D = S + A
    H = pw1.shape[1]
    H8 = tw1.shape[1]
    assert pw1.shape[0] == D and tw1.shape[0] == D

    # pad hidden / output widths to 128-lane multiples
    H_pad = _round_up(H, _LANE)
    H8_pad = _round_up(H8, _LANE)
    D_pad = _round_up(D, _LANE)

    # ---- generation-aware policy -----------------------------------------
    try:
        kind = jax.devices()[0].device_kind.lower()
    except Exception:  # pragma: no cover - defensive
        kind = ""
    is_v7 = "v7" in kind
    bf16_act = ("v6" in kind) or is_v7          # bf16 EUP on v6e/v7x; not v5e
    vmem_cap = (48 if is_v7 else 96) * 1024 * 1024
    if tile_b_max is None:
        tile_b_max = 512 if is_v7 else 1024

    # ---- batch tiling: weights resident, input/output tiles pipelined ----
    B_al = _round_up(max(B, _SUB), _SUB)
    TILE_B = min(tile_b_max, B_al)
    if is_v7 and B_al >= 2 * _SUB:
        # >=2 grid tiles so the "parallel" axis shards across both TensorCores
        TILE_B = min(TILE_B, _round_up(pl.cdiv(B_al, 2), _SUB))
    B_pad = _round_up(B_al, TILE_B)
    num_tiles = B_pad // TILE_B

    # ---- input: fused torch.cat([state, action], 1), shipped as bf16 ----
    x = jnp.concatenate([state, action], axis=1).astype(jnp.bfloat16)
    if B_pad != B:
        x = jnp.pad(x, ((0, B_pad - B), (0, 0)))

    # ---- parameter packing (plain JAX, once per call) --------------------
    def _pad2(m, rows, cols):
        m = jnp.asarray(m, jnp.float32)
        return jnp.pad(m, ((0, rows - m.shape[0]), (0, cols - m.shape[1])))

    def _row(b, cols):
        b = jnp.asarray(b, jnp.float32).reshape(1, -1)
        return jnp.pad(b, ((0, 0), (0, cols - b.shape[1])))

    # fused first layer of both towers: columns = [target(H8_pad) | pred(H_pad)]
    w1 = jnp.concatenate([_pad2(tw1, D, H8_pad), _pad2(pw1, D, H_pad)],
                         axis=1).astype(jnp.bfloat16)
    # predictor layers 2/3 packed along columns: [W2(H_pad) | W3(D_pad)]
    pw23 = jnp.concatenate([_pad2(pw2, H_pad, H_pad), _pad2(pw3, H_pad, D_pad)],
                           axis=1).astype(jnp.bfloat16)
    # target layers 2/3/4 packed along columns: [W2 | W3 | W4]
    tw234 = jnp.concatenate([_pad2(tw2, H8_pad, H8_pad),
                             _pad2(tw3, H8_pad, H8_pad),
                             _pad2(tw4, H8_pad, D_pad)],
                            axis=1).astype(jnp.bfloat16)
    # all seven bias rows in one lane-aligned f32 slab (one DMA stream)
    bias = jnp.concatenate([_row(tb1, H8_pad), _row(pb1, H_pad),
                            _row(pb2, H_pad), _row(pb3, D_pad),
                            _row(tb2, H8_pad), _row(tb3, H8_pad),
                            _row(tb4, D_pad)], axis=1)

    weights = [w1, pw23, tw234, bias]
    param_bytes = sum(int(w.nbytes) for w in weights)

    # ---- VMEM budget -------------------------------------------------------
    io_bytes = 2 * (TILE_B * D * 2) + 2 * (TILE_B * 2 * D_pad * 4)
    act_bytes = 6 * TILE_B * (H8_pad + H_pad) * 4
    if param_bytes + io_bytes + act_bytes > vmem_cap:
        # TODO(synk): add a hidden-dim (K/N) tiled fallback with a VMEM
        # accumulator instead of requiring all weights resident.
        raise ValueError(
            "REDDiscriminator weights + activations (~%d MiB) exceed the ~%d MiB"
            " VMEM budget on this chip; reduce hidden_size or tile_b_max."
            % ((param_bytes + io_bytes + act_bytes) >> 20, vmem_cap >> 20))
    vmem_limit = int(min(vmem_cap,
                         max(16 * 1024 * 1024,
                             2 * param_bytes + io_bytes + act_bytes + (2 << 20))))

    # ---- cost estimate: helps XLA schedule surrounding ops -----------------
    flops = 2 * B_pad * (D * (H8_pad + H_pad) + H_pad * H_pad + H_pad * D_pad
                         + 2 * H8_pad * H8_pad + H8_pad * D_pad)
    transcendentals = B_pad * ((H8_pad + H_pad) + H_pad + 2 * H8_pad)
    bytes_accessed = int(x.nbytes) + param_bytes + B_pad * 2 * D_pad * 4
    cost = pl.CostEstimate(flops=int(flops),
                           transcendentals=int(transcendentals),
                           bytes_accessed=int(bytes_accessed))

    tiled = lambda i: (i, 0)
    resident = lambda i: (0, 0)
    kernel = functools.partial(_red_kernel, H8_pad, H_pad, D_pad, bf16_act)

    def _build(weight_mode):
        if weight_mode is None:
            w_specs = [pl.BlockSpec(w.shape, resident) for w in weights]
        else:
            w_specs = [pl.BlockSpec(w.shape, resident, pipeline_mode=weight_mode)
                       for w in weights]
        return pl.pallas_call(
            kernel,
            out_shape=jax.ShapeDtypeStruct((B_pad, 2 * D_pad), jnp.float32),
            grid=(num_tiles,),
            in_specs=[pl.BlockSpec((TILE_B, D), tiled)] + w_specs,
            out_specs=pl.BlockSpec((TILE_B, 2 * D_pad), tiled),
            compiler_params=pltpu.CompilerParams(
                dimension_semantics=("parallel",),
                vmem_limit_bytes=vmem_limit),
            cost_estimate=cost,
        )

    try:
        # invariant weights (constant index_map): request single buffering to
        # halve resident-weight VMEM (matters for large hidden on v7x 64 MiB).
        out = _build(pl.Buffered(1))(x, *weights)
    except Exception:
        # jax version / backend without per-operand buffer counts
        out = _build(None)(x, *weights)

    prediction = out[:B, :D]
    target = out[:B, D_pad:D_pad + D]
    return prediction, target


def init_red_params(key, state_size, action_size, hidden_size):
    """PyTorch-Linear-style uniform +-1/sqrt(fan_in) init.

    Weights stored pre-transposed as (in_features, out_features); biases (1, out).
    """
    D = state_size + action_size
    H = hidden_size
    H8 = hidden_size * 8

    layer_shapes = [
        (D, H), (H, H), (H, D),                 # predictor (3 layers)
        (D, H8), (H8, H8), (H8, H8), (H8, D),   # target (4 layers)
    ]

    params = []
    for shape in layer_shapes:
        fan_in = shape[0]
        bound = 1.0 / (fan_in ** 0.5)
        key, kw, kb = jax.random.split(key, 3)
        W = jax.random.uniform(kw, shape, jnp.float32, -bound, bound)
        b = jax.random.uniform(kb, (1, shape[1]), jnp.float32, -bound, bound)
        params.append((W, b))
    return params


def _red_reference(state, action, params):
    """Pure-JAX f32 reference (matches the PyTorch forward, eval-mode dropout)."""
    x = jnp.concatenate([state, action], axis=1).astype(jnp.float32)
    (pw1, pb1), (pw2, pb2), (pw3, pb3), \
        (tw1, tb1), (tw2, tb2), (tw3, tb3), (tw4, tb4) = params
    h = jnp.tanh(x @ pw1 + pb1)
    h = jnp.tanh(h @ pw2 + pb2)
    pred = h @ pw3 + pb3
    g = jnp.tanh(x @ tw1 + tb1)
    g = jnp.tanh(g @ tw2 + tb2)
    g = jnp.tanh(g @ tw3 + tb3)
    targ = g @ tw4 + tb4
    return pred, targ


if __name__ == "__main__":
    batch = 12          # intentionally not a multiple of 8 -> exercises padding
    state_size = 12
    action_size = 4
    hidden_size = 32    # target tower width H8 = 256

    key = jax.random.PRNGKey(0)
    kp, ks, ka = jax.random.split(key, 3)

    params = init_red_params(kp, state_size, action_size, hidden_size)
    state = jax.random.normal(ks, (batch, state_size), jnp.float32)
    action = jax.random.normal(ka, (batch, action_size), jnp.float32)

    prediction, target = red_discriminator_forward(state, action, params)
    jax.block_until_ready((prediction, target))

    D = state_size + action_size
    assert prediction.shape == (batch, D)
    assert target.shape == (batch, D)
    assert prediction.dtype == jnp.float32 and target.dtype == jnp.float32

    # bf16 matmul inputs (and bf16 tanh on v6e/v7x) with f32 accumulation ->
    # compare against the f32 reference with a loose tolerance
    pred_ref, targ_ref = _red_reference(state, action, params)
    err = max(float(jnp.max(jnp.abs(prediction - pred_ref))),
              float(jnp.max(jnp.abs(target - targ_ref))))
    assert err < 1e-1, f"numerical mismatch vs f32 reference: {err}"

    print("KERNEL_OK")
</pallas_src>

<mosaic_0001>
module attributes {stable_mosaic.version = 11 : i64} {
  func.func @_red_kernel(%arg0: i32, %arg1: memref<16x16xbf16, #tpu.memory_space<vmem>>, %arg2: memref<16x384xbf16, #tpu.memory_space<vmem>>, %arg3: memref<128x256xbf16, #tpu.memory_space<vmem>>, %arg4: memref<256x640xbf16, #tpu.memory_space<vmem>>, %arg5: memref<1x1280xf32, #tpu.memory_space<vmem>>, %arg6: memref<16x256xf32, #tpu.memory_space<vmem>>) attributes {dimension_semantics = [#tpu.dimension_semantics<parallel>], iteration_bounds = array<i64: 1>, scalar_prefetch = 0 : i64, scratch_operands = 0 : i64, tpu.core_type = #tpu.core_type<tc>, window_params = [{transform_indices = @transform_0, window_bounds = array<i64: 16, 16>}, {pipeline_mode = #tpu.pipeline_mode<synchronous>, transform_indices = @transform_1, window_bounds = array<i64: 16, 384>}, {pipeline_mode = #tpu.pipeline_mode<synchronous>, transform_indices = @transform_2, window_bounds = array<i64: 128, 256>}, {pipeline_mode = #tpu.pipeline_mode<synchronous>, transform_indices = @transform_3, window_bounds = array<i64: 256, 640>}, {pipeline_mode = #tpu.pipeline_mode<synchronous>, transform_indices = @transform_4, window_bounds = array<i64: 1, 1280>}, {transform_indices = @transform_5, window_bounds = array<i64: 16, 256>}]} {
    %c0 = arith.constant 0 : index
    %c0_0 = arith.constant 0 : index
    %0 = vector.load %arg1[%c0, %c0_0] : memref<16x16xbf16, #tpu.memory_space<vmem>>, vector<16x16xbf16>
    %c0_1 = arith.constant 0 : index
    %c0_2 = arith.constant 0 : index
    %1 = vector.load %arg2[%c0_1, %c0_2] : memref<16x384xbf16, #tpu.memory_space<vmem>>, vector<16x384xbf16>
    %cst = arith.constant dense<0.000000e+00> : vector<16x384xf32>
    %2 = tpu.matmul %0, %1, %cst {dimension_numbers = #tpu.dot_dimension_numbers<[1], [0], [0], [1], [0, 0, 1, 1], [], []>} : vector<16x16xbf16>, vector<16x384xbf16>, vector<16x384xf32> -> vector<16x384xf32>
    %c0_3 = arith.constant 0 : index
    %c0_4 = arith.constant 0 : index
    %3 = vector.load %arg5[%c0_3, %c0_4] : memref<1x1280xf32, #tpu.memory_space<vmem>>, vector<1x384xf32>
    %4 = vector.broadcast %3 : vector<1x384xf32> to vector<16x384xf32>
    %5 = arith.addf %2, %4 : vector<16x384xf32>
    %6 = math.tanh %5 : vector<16x384xf32>
    %7 = arith.truncf %6 : vector<16x384xf32> to vector<16x384xbf16>
    %8 = vector.extract_strided_slice %7 {offsets = [0, 0], sizes = [16, 256], strides = [1, 1]} : vector<16x384xbf16> to vector<16x256xbf16>
    %9 = vector.extract_strided_slice %7 {offsets = [0, 256], sizes = [16, 128], strides = [1, 1]} : vector<16x384xbf16> to vector<16x128xbf16>
    %c0_5 = arith.constant 0 : index
    %c0_6 = arith.constant 0 : index
    %10 = vector.load %arg3[%c0_5, %c0_6] : memref<128x256xbf16, #tpu.memory_space<vmem>>, vector<128x128xbf16>
    %cst_7 = arith.constant dense<0.000000e+00> : vector<16x128xf32>
    %11 = tpu.matmul %9, %10, %cst_7 {dimension_numbers = #tpu.dot_dimension_numbers<[1], [0], [0], [1], [0, 0, 1, 1], [], []>} : vector<16x128xbf16>, vector<128x128xbf16>, vector<16x128xf32> -> vector<16x128xf32>
    %c0_8 = arith.constant 0 : index
    %c384 = arith.constant 384 : index
    %12 = vector.load %arg5[%c0_8, %c384] : memref<1x1280xf32, #tpu.memory_space<vmem>>, vector<1x128xf32>
    %13 = vector.broadcast %12 : vector<1x128xf32> to vector<16x128xf32>
    %14 = arith.addf %11, %13 : vector<16x128xf32>
    %15 = math.tanh %14 : vector<16x128xf32>
    %16 = arith.truncf %15 : vector<16x128xf32> to vector<16x128xbf16>
    %c0_9 = arith.constant 0 : index
    %c128 = arith.constant 128 : index
    %17 = vector.load %arg3[%c0_9, %c128] : memref<128x256xbf16, #tpu.memory_space<vmem>>, vector<128x128xbf16>
    %cst_10 = arith.constant dense<0.000000e+00> : vector<16x128xf32>
    %18 = tpu.matmul %16, %17, %cst_10 {dimension_numbers = #tpu.dot_dimension_numbers<[1], [0], [0], [1], [0, 0, 1, 1], [], []>} : vector<16x128xbf16>, vector<128x128xbf16>, vector<16x128xf32> -> vector<16x128xf32>
    %c0_11 = arith.constant 0 : index
    %c512 = arith.constant 512 : index
    %19 = vector.load %arg5[%c0_11, %c512] : memref<1x1280xf32, #tpu.memory_space<vmem>>, vector<1x128xf32>
    %20 = vector.broadcast %19 : vector<1x128xf32> to vector<16x128xf32>
    %21 = arith.addf %18, %20 : vector<16x128xf32>
    %c0_12 = arith.constant 0 : index
    %c0_13 = arith.constant 0 : index
    %22 = vector.load %arg4[%c0_12, %c0_13] : memref<256x640xbf16, #tpu.memory_space<vmem>>, vector<256x256xbf16>
    %cst_14 = arith.constant dense<0.000000e+00> : vector<16x256xf32>
    %23 = tpu.matmul %8, %22, %cst_14 {dimension_numbers = #tpu.dot_dimension_numbers<[1], [0], [0], [1], [0, 0, 1, 1], [], []>} : vector<16x256xbf16>, vector<256x256xbf16>, vector<16x256xf32> -> vector<16x256xf32>
    %c0_15 = arith.constant 0 : index
    %c640 = arith.constant 640 : index
    %24 = vector.load %arg5[%c0_15, %c640] : memref<1x1280xf32, #tpu.memory_space<vmem>>, vector<1x256xf32>
    %25 = vector.broadcast %24 : vector<1x256xf32> to vector<16x256xf32>
    %26 = arith.addf %23, %25 : vector<16x256xf32>
    %27 = math.tanh %26 : vector<16x256xf32>
    %28 = arith.truncf %27 : vector<16x256xf32> to vector<16x256xbf16>
    %c0_16 = arith.constant 0 : index
    %c256 = arith.constant 256 : index
    %29 = vector.load %arg4[%c0_16, %c256] : memref<256x640xbf16, #tpu.memory_space<vmem>>, vector<256x256xbf16>
    %cst_17 = arith.constant dense<0.000000e+00> : vector<16x256xf32>
    %30 = tpu.matmul %28, %29, %cst_17 {dimension_numbers = #tpu.dot_dimension_numbers<[1], [0], [0], [1], [0, 0, 1, 1], [], []>} : vector<16x256xbf16>, vector<256x256xbf16>, vector<16x256xf32> -> vector<16x256xf32>
    %c0_18 = arith.constant 0 : index
    %c896 = arith.constant 896 : index
    %31 = vector.load %arg5[%c0_18, %c896] : memref<1x1280xf32, #tpu.memory_space<vmem>>, vector<1x256xf32>
    %32 = vector.broadcast %31 : vector<1x256xf32> to vector<16x256xf32>
    %33 = arith.addf %30, %32 : vector<16x256xf32>
    %34 = math.tanh %33 : vector<16x256xf32>
    %35 = arith.truncf %34 : vector<16x256xf32> to vector<16x256xbf16>
    %c0_19 = arith.constant 0 : index
    %c512_20 = arith.constant 512 : index
    %36 = vector.load %arg4[%c0_19, %c512_20] : memref<256x640xbf16, #tpu.memory_space<vmem>>, vector<256x128xbf16>
    %cst_21 = arith.constant dense<0.000000e+00> : vector<16x128xf32>
    %37 = tpu.matmul %35, %36, %cst_21 {dimension_numbers = #tpu.dot_dimension_numbers<[1], [0], [0], [1], [0, 0, 1, 1], [], []>} : vector<16x256xbf16>, vector<256x128xbf16>, vector<16x128xf32> -> vector<16x128xf32>
    %c0_22 = arith.constant 0 : index
    %c1152 = arith.constant 1152 : index
    %38 = vector.load %arg5[%c0_22, %c1152] : memref<1x1280xf32, #tpu.memory_space<vmem>>, vector<1x128xf32>
    %39 = vector.broadcast %38 : vector<1x128xf32> to vector<16x128xf32>
    %40 = arith.addf %37, %39 : vector<16x128xf32>
    %c0_23 = arith.constant 0 : index
    %c0_24 = arith.constant 0 : index
    %41 = vector.load %arg6[%c0_23, %c0_24] : memref<16x256xf32, #tpu.memory_space<vmem>>, vector<16x128xf32>
    tpu.vector_store %arg6[%c0_23, %c0_24], %21 {strides = array<i32>} : memref<16x256xf32, #tpu.memory_space<vmem>>, vector<16x128xf32>,
    %c0_25 = arith.constant 0 : index
    %c128_26 = arith.constant 128 : index
    %42 = vector.load %arg6[%c0_25, %c128_26] : memref<16x256xf32, #tpu.memory_space<vmem>>, vector<16x128xf32>
    tpu.vector_store %arg6[%c0_25, %c128_26], %40 {strides = array<i32>} : memref<16x256xf32, #tpu.memory_space<vmem>>, vector<16x128xf32>,
    return
  }
  func.func @transform_0(%arg0: i32) -> (i32, i32) {
    %c0_i32 = arith.constant 0 : i32
    %c0_i32_0 = arith.constant 0 : i32
    return %arg0, %c0_i32 : i32, i32
  }
  func.func @transform_1(%arg0: i32) -> (i32, i32) {
    %c0_i32 = arith.constant 0 : i32
    %c0_i32_0 = arith.constant 0 : i32
    %c0_i32_1 = arith.constant 0 : i32
    return %c0_i32, %c0_i32_0 : i32, i32
  }
  func.func @transform_2(%arg0: i32) -> (i32, i32) {
    %c0_i32 = arith.constant 0 : i32
    %c0_i32_0 = arith.constant 0 : i32
    %c0_i32_1 = arith.constant 0 : i32
    return %c0_i32, %c0_i32_0 : i32, i32
  }
  func.func @transform_3(%arg0: i32) -> (i32, i32) {
    %c0_i32 = arith.constant 0 : i32
    %c0_i32_0 = arith.constant 0 : i32
    %c0_i32_1 = arith.constant 0 : i32
    return %c0_i32, %c0_i32_0 : i32, i32
  }
  func.func @transform_4(%arg0: i32) -> (i32, i32) {
    %c0_i32 = arith.constant 0 : i32
    %c0_i32_0 = arith.constant 0 : i32
    %c0_i32_1 = arith.constant 0 : i32
    return %c0_i32, %c0_i32_0 : i32, i32
  }
  func.func @transform_5(%arg0: i32) -> (i32, i32) {
    %c0_i32 = arith.constant 0 : i32
    %c0_i32_0 = arith.constant 0 : i32
    return %arg0, %c0_i32 : i32, i32
  }
}

module attributes {stable_mosaic.version = 11 : i64} {
  func.func @_red_kernel(%arg0: i32, %arg1: memref<16x16xbf16, #tpu.memory_space<vmem>>, %arg2: memref<16x384xbf16, #tpu.memory_space<vmem>>, %arg3: memref<128x256xbf16, #tpu.memory_space<vmem>>, %arg4: memref<256x640xbf16, #tpu.memory_space<vmem>>, %arg5: memref<1x1280xf32, #tpu.memory_space<vmem>>, %arg6: memref<16x256xf32, #tpu.memory_space<vmem>>) attributes {dimension_semantics = [#tpu.dimension_semantics<parallel>], iteration_bounds = array<i64: 1>, scalar_prefetch = 0 : i64, scratch_operands = 0 : i64, tpu.core_type = #tpu.core_type<tc>, window_params = [{transform_indices = @transform_0, window_bounds = array<i64: 16, 16>}, {pipeline_mode = #tpu.pipeline_mode<synchronous>, transform_indices = @transform_1, window_bounds = array<i64: 16, 384>}, {pipeline_mode = #tpu.pipeline_mode<synchronous>, transform_indices = @transform_2, window_bounds = array<i64: 128, 256>}, {pipeline_mode = #tpu.pipeline_mode<synchronous>, transform_indices = @transform_3, window_bounds = array<i64: 256, 640>}, {pipeline_mode = #tpu.pipeline_mode<synchronous>, transform_indices = @transform_4, window_bounds = array<i64: 1, 1280>}, {transform_indices = @transform_5, window_bounds = array<i64: 16, 256>}]} {
    %c0 = arith.constant 0 : index
    %c0_0 = arith.constant 0 : index
    %0 = vector.load %arg1[%c0, %c0_0] : memref<16x16xbf16, #tpu.memory_space<vmem>>, vector<16x16xbf16>
    %c0_1 = arith.constant 0 : index
    %c0_2 = arith.constant 0 : index
    %1 = vector.load %arg2[%c0_1, %c0_2] : memref<16x384xbf16, #tpu.memory_space<vmem>>, vector<16x384xbf16>
    %cst = arith.constant dense<0.000000e+00> : vector<16x384xf32>
    %2 = tpu.matmul %0, %1, %cst {dimension_numbers = #tpu.dot_dimension_numbers<[1], [0], [0], [1], [0, 0, 1, 1], [], []>} : vector<16x16xbf16>, vector<16x384xbf16>, vector<16x384xf32> -> vector<16x384xf32>
    %c0_3 = arith.constant 0 : index
    %c0_4 = arith.constant 0 : index
    %3 = vector.load %arg5[%c0_3, %c0_4] : memref<1x1280xf32, #tpu.memory_space<vmem>>, vector<1x384xf32>
    %4 = vector.broadcast %3 : vector<1x384xf32> to vector<16x384xf32>
    %5 = arith.addf %2, %4 : vector<16x384xf32>
    %6 = math.tanh %5 : vector<16x384xf32>
    %7 = arith.truncf %6 : vector<16x384xf32> to vector<16x384xbf16>
    %8 = vector.extract_strided_slice %7 {offsets = [0, 0], sizes = [16, 256], strides = [1, 1]} : vector<16x384xbf16> to vector<16x256xbf16>
    %9 = vector.extract_strided_slice %7 {offsets = [0, 256], sizes = [16, 128], strides = [1, 1]} : vector<16x384xbf16> to vector<16x128xbf16>
    %c0_5 = arith.constant 0 : index
    %c0_6 = arith.constant 0 : index
    %10 = vector.load %arg3[%c0_5, %c0_6] : memref<128x256xbf16, #tpu.memory_space<vmem>>, vector<128x128xbf16>
    %cst_7 = arith.constant dense<0.000000e+00> : vector<16x128xf32>
    %11 = tpu.matmul %9, %10, %cst_7 {dimension_numbers = #tpu.dot_dimension_numbers<[1], [0], [0], [1], [0, 0, 1, 1], [], []>} : vector<16x128xbf16>, vector<128x128xbf16>, vector<16x128xf32> -> vector<16x128xf32>
    %c0_8 = arith.constant 0 : index
    %c384 = arith.constant 384 : index
    %12 = vector.load %arg5[%c0_8, %c384] : memref<1x1280xf32, #tpu.memory_space<vmem>>, vector<1x128xf32>
    %13 = vector.broadcast %12 : vector<1x128xf32> to vector<16x128xf32>
    %14 = arith.addf %11, %13 : vector<16x128xf32>
    %15 = math.tanh %14 : vector<16x128xf32>
    %16 = arith.truncf %15 : vector<16x128xf32> to vector<16x128xbf16>
    %c0_9 = arith.constant 0 : index
    %c128 = arith.constant 128 : index
    %17 = vector.load %arg3[%c0_9, %c128] : memref<128x256xbf16, #tpu.memory_space<vmem>>, vector<128x128xbf16>
    %cst_10 = arith.constant dense<0.000000e+00> : vector<16x128xf32>
    %18 = tpu.matmul %16, %17, %cst_10 {dimension_numbers = #tpu.dot_dimension_numbers<[1], [0], [0], [1], [0, 0, 1, 1], [], []>} : vector<16x128xbf16>, vector<128x128xbf16>, vector<16x128xf32> -> vector<16x128xf32>
    %c0_11 = arith.constant 0 : index
    %c512 = arith.constant 512 : index
    %19 = vector.load %arg5[%c0_11, %c512] : memref<1x1280xf32, #tpu.memory_space<vmem>>, vector<1x128xf32>
    %20 = vector.broadcast %19 : vector<1x128xf32> to vector<16x128xf32>
    %21 = arith.addf %18, %20 : vector<16x128xf32>
    %c0_12 = arith.constant 0 : index
    %c0_13 = arith.constant 0 : index
    %22 = vector.load %arg4[%c0_12, %c0_13] : memref<256x640xbf16, #tpu.memory_space<vmem>>, vector<256x256xbf16>
    %cst_14 = arith.constant dense<0.000000e+00> : vector<16x256xf32>
    %23 = tpu.matmul %8, %22, %cst_14 {dimension_numbers = #tpu.dot_dimension_numbers<[1], [0], [0], [1], [0, 0, 1, 1], [], []>} : vector<16x256xbf16>, vector<256x256xbf16>, vector<16x256xf32> -> vector<16x256xf32>
    %c0_15 = arith.constant 0 : index
    %c640 = arith.constant 640 : index
    %24 = vector.load %arg5[%c0_15, %c640] : memref<1x1280xf32, #tpu.memory_space<vmem>>, vector<1x256xf32>
    %25 = vector.broadcast %24 : vector<1x256xf32> to vector<16x256xf32>
    %26 = arith.addf %23, %25 : vector<16x256xf32>
    %27 = math.tanh %26 : vector<16x256xf32>
    %28 = arith.truncf %27 : vector<16x256xf32> to vector<16x256xbf16>
    %c0_16 = arith.constant 0 : index
    %c256 = arith.constant 256 : index
    %29 = vector.load %arg4[%c0_16, %c256] : memref<256x640xbf16, #tpu.memory_space<vmem>>, vector<256x256xbf16>
    %cst_17 = arith.constant dense<0.000000e+00> : vector<16x256xf32>
    %30 = tpu.matmul %28, %29, %cst_17 {dimension_numbers = #tpu.dot_dimension_numbers<[1], [0], [0], [1], [0, 0, 1, 1], [], []>} : vector<16x256xbf16>, vector<256x256xbf16>, vector<16x256xf32> -> vector<16x256xf32>
    %c0_18 = arith.constant 0 : index
    %c896 = arith.constant 896 : index
    %31 = vector.load %arg5[%c0_18, %c896] : memref<1x1280xf32, #tpu.memory_space<vmem>>, vector<1x256xf32>
    %32 = vector.broadcast %31 : vector<1x256xf32> to vector<16x256xf32>
    %33 = arith.addf %30, %32 : vector<16x256xf32>
    %34 = math.tanh %33 : vector<16x256xf32>
    %35 = arith.truncf %34 : vector<16x256xf32> to vector<16x256xbf16>
    %c0_19 = arith.constant 0 : index
    %c512_20 = arith.constant 512 : index
    %36 = vector.load %arg4[%c0_19, %c512_20] : memref<256x640xbf16, #tpu.memory_space<vmem>>, vector<256x128xbf16>
    %cst_21 = arith.constant dense<0.000000e+00> : vector<16x128xf32>
    %37 = tpu.matmul %35, %36, %cst_21 {dimension_numbers = #tpu.dot_dimension_numbers<[1], [0], [0], [1], [0, 0, 1, 1], [], []>} : vector<16x256xbf16>, vector<256x128xbf16>, vector<16x128xf32> -> vector<16x128xf32>
    %c0_22 = arith.constant 0 : index
    %c1152 = arith.constant 1152 : index
    %38 = vector.load %arg5[%c0_22, %c1152] : memref<1x1280xf32, #tpu.memory_space<vmem>>, vector<1x128xf32>
    %39 = vector.broadcast %38 : vector<1x128xf32> to vector<16x128xf32>
    %40 = arith.addf %37, %39 : vector<16x128xf32>
    %c0_23 = arith.constant 0 : index
    %c0_24 = arith.constant 0 : index
    %41 = vector.load %arg6[%c0_23, %c0_24] : memref<16x256xf32, #tpu.memory_space<vmem>>, vector<16x128xf32>
    tpu.vector_store %arg6[%c0_23, %c0_24], %21 {strides = array<i32>} : memref<16x256xf32, #tpu.memory_space<vmem>>, vector<16x128xf32>,
    %c0_25 = arith.constant 0 : index
    %c128_26 = arith.constant 128 : index
    %42 = vector.load %arg6[%c0_25, %c128_26] : memref<16x256xf32, #tpu.memory_space<vmem>>, vector<16x128xf32>
    tpu.vector_store %arg6[%c0_25, %c128_26], %40 {strides = array<i32>} : memref<16x256xf32, #tpu.memory_space<vmem>>, vector<16x128xf32>,
    return
  }
  func.func @transform_0(%arg0: i32) -> (i32, i32) {
    %c0_i32 = arith.constant 0 : i32
    %c0_i32_0 = arith.constant 0 : i32
    return %arg0, %c0_i32 : i32, i32
  }
  func.func @transform_1(%arg0: i32) -> (i32, i32) {
    %c0_i32 = arith.constant 0 : i32
    %c0_i32_0 = arith.constant 0 : i32
    %c0_i32_1 = arith.constant 0 : i32
    return %c0_i32, %c0_i32_0 : i32, i32
  }
  func.func @transform_2(%arg0: i32) -> (i32, i32) {
    %c0_i32 = arith.constant 0 : i32
    %c0_i32_0 = arith.constant 0 : i32
    %c0_i32_1 = arith.constant 0 : i32
    return %c0_i32, %c0_i32_0 : i32, i32
  }
  func.func @transform_3(%arg0: i32) -> (i32, i32) {
    %c0_i32 = arith.constant 0 : i32
    %c0_i32_0 = arith.constant 0 : i32
    %c0_i32_1 = arith.constant 0 : i32
    return %c0_i32, %c0_i32_0 : i32, i32
  }
  func.func @transform_4(%arg0: i32) -> (i32, i32) {
    %c0_i32 = arith.constant 0 : i32
    %c0_i32_0 = arith.constant 0 : i32
    %c0_i32_1 = arith.constant 0 : i32
    return %c0_i32, %c0_i32_0 : i32, i32
  }
  func.func @transform_5(%arg0: i32) -> (i32, i32) {
    %c0_i32 = arith.constant 0 : i32
    %c0_i32_0 = arith.constant 0 : i32
    return %arg0, %c0_i32 : i32, i32
  }
}

</mosaic_0001>

<llo_original>
// kernel: tpu_custom_call.1
$region0: #{tpu_custom_call.1}
  #allocation0 [shape = 'u32[]', space=smem, size = 0x4, offset = 0x4, fixed_abs, tag = 'smem constant byte address 0x4 - core index']
  #allocation1 [shape = 'u32[144,128]{1,0:T(1,128)}', space=vmem, size = 0x12000, scoped, tag = 'internal scratch']
  %s0 = inlined_call_operand.hbm [shape: bf16[16,16], index: 0, kind: input, shape index: {}]
  %s1 = inlined_call_operand.hbm [shape: bf16[16,384], index: 1, kind: input, shape index: {}]
  %s2 = inlined_call_operand.hbm [shape: bf16[128,256], index: 2, kind: input, shape index: {}]
  %s3 = inlined_call_operand.hbm [shape: bf16[256,640], index: 3, kind: input, shape index: {}]
  %s4 = inlined_call_operand.vmem [shape: f32[1,1280], index: 4, kind: input, shape index: {}]
  %s5 = inlined_call_operand.hbm [shape: f32[16,256], index: 5, kind: output, shape index: {}]
  %s6 = sld [smem:[#allocation0]]
  $region46: #{tpu_custom_call.1} parent=0
    _
  %s8 = ssub.s32 1, %s6
  %s9 = scalar_select 0, %s8, %s6
  $region1: #{tpu_custom_call.1} parent=0
    #allocation2 [shape = 'u8[4096]{0}', space=vmem, size = 0x1000, scoped, tag = 'input window, operand 0, single buffered']
    #allocation3 [shape = 's32[1]{0}', space=sflag, size = 0x4, scoped, tag = 'scoped memory for tpu_custom_call.1']
    #allocation4 [shape = 's32[1]{0}', space=sflag, size = 0x4, scoped, tag = 'scoped memory for tpu_custom_call.1']
    #allocation5 [shape = 'u8[12288]{0}', space=vmem, size = 0x3000, scoped, tag = 'input window, operand 1, single buffered']
    #allocation6 [shape = 's32[1]{0}', space=sflag, size = 0x4, scoped, tag = 'scoped memory for tpu_custom_call.1']
    #allocation7 [shape = 'u8[65536]{0}', space=vmem, size = 0x10000, scoped, tag = 'input window, operand 2, single buffered']
    #allocation8 [shape = 'u8[327680]{0}', space=vmem, size = 0x50000, scoped, tag = 'input window, operand 3, single buffered']
    #allocation9 [shape = 's32[1]{0}', space=sflag, size = 0x4, scoped, tag = 'scoped memory for tpu_custom_call.1']
    #allocation10 [shape = 'u8[16384]{0}', space=vmem, size = 0x4000, scoped, tag = 'output window, operand 0, single buffered']
    %10 = vsyncpa [#allocation3], 0
    %11 = vsyncpa [#allocation6], 0
    %12 = vsyncpa [#allocation9], 0
    %13 = vsyncpa [#allocation4], 0
    // Predicated region
    $region2: #{tpu_custom_call.1} parent=1 // pred_check
      _
    $region3: #{tpu_custom_call.1} parent=1 // pred_check_branch
      %15 = sbr.rel (0) target = $region5
    $region4: #{tpu_custom_call.1} parent=1 // pred_region
      %s17 = ssub.s32 128, 128
      %18 = vsyncadd [#allocation3], %s17
      %s19 = sshll.u32 [#allocation2], 4
      %s20 = int_to_ptr.vmem [resolvable:$true] %s19
      %25 = dma.hbm_to_vmem [thread:$0]  %s0, 128, %s20, [#allocation3], 64, 64, 4
    $region5: #{tpu_custom_call.1} parent=1 // pred_fallthru
      _
    // Predicated region
    $region6: #{tpu_custom_call.1} parent=1 // pred_check
      _
    $region7: #{tpu_custom_call.1} parent=1 // pred_check_branch
      %27 = sbr.rel (0) target = $region9
    $region8: #{tpu_custom_call.1} parent=1 // pred_region
      %s29 = ssub.s32 384, 384
      %30 = vsyncadd [#allocation6], %s29
      %s31 = sshll.u32 [#allocation5], 4
      %s32 = int_to_ptr.vmem [resolvable:$true] %s31
      %37 = dma.hbm_to_vmem [thread:$0]  %s1, 384, %s32, [#allocation6], 192, 192, 12
    $region9: #{tpu_custom_call.1} parent=1 // pred_fallthru
      _
    // Predicated region
    $region10: #{tpu_custom_call.1} parent=1 // pred_check
      _
    $region11: #{tpu_custom_call.1} parent=1 // pred_check_branch
      %39 = sbr.rel (0) target = $region13
    $region12: #{tpu_custom_call.1} parent=1 // pred_region
      %s41 = ssub.s32 2048, 2048
      %42 = vsyncadd [#allocation6], %s41
      %s43 = sshll.u32 [#allocation7], 4
      %s44 = int_to_ptr.vmem [resolvable:$true] %s43
      %49 = dma.hbm_to_vmem [thread:$0]  %s2, 2048, %s44, [#allocation6], 128, 128, 8
    $region13: #{tpu_custom_call.1} parent=1 // pred_fallthru
      _
    // Predicated region
    $region14: #{tpu_custom_call.1} parent=1 // pred_check
      _
    $region15: #{tpu_custom_call.1} parent=1 // pred_check_branch
      %51 = sbr.rel (0) target = $region17
    $region16: #{tpu_custom_call.1} parent=1 // pred_region
      %s53 = ssub.s32 10240, 10240
      %54 = vsyncadd [#allocation9], %s53
      %s55 = sshll.u32 [#allocation8], 4
      %s56 = int_to_ptr.vmem [resolvable:$true] %s55
      %61 = dma.hbm_to_vmem [thread:$0]  %s3, 10240, %s56, [#allocation9], 320, 320, 20
    $region17: #{tpu_custom_call.1} parent=1 // pred_fallthru
      _
    // Predicated region
    $region18: #{tpu_custom_call.1} parent=1 // pred_check
      _
    $region19: #{tpu_custom_call.1} parent=1 // pred_check_branch
      %63 = sbr.rel (0) target = $region21
    $region20: #{tpu_custom_call.1} parent=1 // pred_region
      _
    $region21: #{tpu_custom_call.1} parent=1 // pred_fallthru
      _
    // Predicated region
    $region22: #{tpu_custom_call.1} parent=1 // pred_check
      _
    $region23: #{tpu_custom_call.1} parent=1 // pred_check_branch
      %65 = sbr.rel (0) target = $region25
    $region24: #{tpu_custom_call.1} parent=1 // pred_region
      %66 = dma.done [#allocation3], 128
    $region25: #{tpu_custom_call.1} parent=1 // pred_fallthru
      _
    // Predicated region
    $region26: #{tpu_custom_call.1} parent=1 // pred_check
      _
    $region27: #{tpu_custom_call.1} parent=1 // pred_check_branch
      %68 = sbr.rel (0) target = $region29
    $region28: #{tpu_custom_call.1} parent=1 // pred_region
      %69 = dma.done [#allocation6], 384
    $region29: #{tpu_custom_call.1} parent=1 // pred_fallthru
      _
    // Predicated region
    $region30: #{tpu_custom_call.1} parent=1 // pred_check
      _
    $region31: #{tpu_custom_call.1} parent=1 // pred_check_branch
      %71 = sbr.rel (0) target = $region33
    $region32: #{tpu_custom_call.1} parent=1 // pred_region
      %72 = dma.done [#allocation6], 2048
    $region33: #{tpu_custom_call.1} parent=1 // pred_fallthru
      _
    // Predicated region
    $region34: #{tpu_custom_call.1} parent=1 // pred_check
      _
    $region35: #{tpu_custom_call.1} parent=1 // pred_check_branch
      %74 = sbr.rel (0) target = $region37
    $region36: #{tpu_custom_call.1} parent=1 // pred_region
      %75 = dma.done [#allocation9], 10240
    $region37: #{tpu_custom_call.1} parent=1 // pred_fallthru
      _
    %v77 = vld [vmem:[#allocation2] sm:$0xf]
    %v78 = vld [vmem:[#allocation2 + $0x4] sm:$0xf]
    %v79 = vld [vmem:[#allocation5] sm:$0xff]
    %v80 = vld [vmem:[#allocation5 + $0x8] sm:$0xf]
    %v81 = vld [vmem:[#allocation5 + $0xc] sm:$0xff]
    %v82 = vld [vmem:[#allocation5 + $0x14] sm:$0xf]
    %v83 = vld [vmem:[%s4] sm:$0x7]
    %v85 = vlaneseq
    %v86 = vshrl.u32 %v85, 7
    %v87 = vsub.s32 0, %v86
    %v88 = vrot.slane %v83, %v87
    %v89 = vlaneseq
    %v90 = vshrl.u32 %v89, 7
    %v91 = vsub.s32 1, %v90
    %v92 = vrot.slane %v83, %v91
    %v93 = vlaneseq
    %v94 = vshrl.u32 %v93, 7
    %v95 = vsub.s32 2, %v94
    %v96 = vrot.slane %v83, %v95
    %v102 = vunpack.c.l.b16 %v77
    %v103 = vunpack.c.l.b16 %v78
    %v104 = vpack.c.b16 %v103, %v102
    %v109 = vunpack.c.l.b16 %v79
    %v110 = vunpack.c.h.b16 %v79
    %v111 = vunpack.c.l.b16 %v80
    %v112 = vunpack.c.l.b16 %v81
    %v113 = vunpack.c.h.b16 %v81
    %v114 = vunpack.c.l.b16 %v82
    %v115 = vpack.c.b16 %v112, %v109
    %v116 = vpack.c.b16 %v113, %v110
    %v117 = vpack.c.b16 %v114, %v111
    %vm121 = vcmask 130048
    %v123 = vsel %vm121, %v104, 0
    %125 = vmatprep.subr.bf16.mxu0 %v116
    %126 = vmatpush1.bf16.msra.mxu0 %v115
    %127 = vmatprep.subr.bf16.mxu0 0
    %128 = vmatpush1.bf16.msra.mxu0 0
    %129 = vmatprep.subr.bf16.mxu0 0
    %130 = vmatpush1.bf16.msra.mxu0 0
    %131 = vmatprep.subr.bf16.mxu0 0
    %132 = vmatpush1.bf16.msra.mxu0 0
    %133 = vmatprep.subr.bf16.mxu0 0
    %134 = vmatpush1.bf16.msra.mxu0 0
    %135 = vmatprep.subr.bf16.mxu0 0
    %136 = vmatpush1.bf16.msra.mxu0 0
    %137 = vmatprep.subr.bf16.mxu0 0
    %138 = vmatpush1.bf16.msra.mxu0 0
    %139 = vmatprep.subr.bf16.mxu0 0
    %140 = vmatpush1.bf16.msra.mxu0 0
    %141 = vmatprep.subr.bf16.mxu0 0
    %142 = vmatpush1.bf16.msra.mxu0 0
    %143 = vmatprep.subr.bf16.mxu0 0
    %144 = vmatpush1.bf16.msra.mxu0 0
    %145 = vmatprep.subr.bf16.mxu0 0
    %146 = vmatpush1.bf16.msra.mxu0 0
    %147 = vmatprep.subr.bf16.mxu0 0
    %148 = vmatpush1.bf16.msra.mxu0 0
    %149 = vmatprep.subr.bf16.mxu0 0
    %150 = vmatpush1.bf16.msra.mxu0 0
    %151 = vmatprep.subr.bf16.mxu0 0
    %152 = vmatpush1.bf16.msra.mxu0 0
    %153 = vmatprep.subr.bf16.mxu0 0
    %154 = vmatpush1.bf16.msra.mxu0 0
    %155 = vmatprep.subr.bf16.mxu0 0
    %156 = vmatpush1.bf16.msra.mxu0 0
    %157 = vmatprep.mubr.bf16.mxu0 0
    %158 = vmatmul.mubr.bf16.gmra.mrb[0].mxu0 %v123
    %v159 = vpop.f32.mrb[0].mxu0
    %v160 = vadd.f32 %v88, %v159
    %v161 = vpop.f32.mrb[0].mxu0
    %v162 = vadd.f32 %v92, %v161
    %v163 = vpop.f32.mrb[0].mxu0
    %v164 = vadd.f32 %v88, %v163
    %v165 = vpop.f32.mrb[0].mxu0
    %v166 = vadd.f32 %v92, %v165
    %167 = vdwg.mxu0
    %168 = vmatprep.subr.bf16.mxu0 0
    %169 = vmatpush1.bf16.msra.mxu0 %v117
    %170 = vmatprep.subr.bf16.mxu0 0
    %171 = vmatpush1.bf16.msra.mxu0 0
    %172 = vmatprep.subr.bf16.mxu0 0
    %173 = vmatpush1.bf16.msra.mxu0 0
    %174 = vmatprep.subr.bf16.mxu0 0
    %175 = vmatpush1.bf16.msra.mxu0 0
    %176 = vmatprep.subr.bf16.mxu0 0
    %177 = vmatpush1.bf16.msra.mxu0 0
    %178 = vmatprep.subr.bf16.mxu0 0
    %179 = vmatpush1.bf16.msra.mxu0 0
    %180 = vmatprep.subr.bf16.mxu0 0
    %181 = vmatpush1.bf16.msra.mxu0 0
    %182 = vmatprep.subr.bf16.mxu0 0
    %183 = vmatpush1.bf16.msra.mxu0 0
    %184 = vmatprep.subr.bf16.mxu0 0
    %185 = vmatpush1.bf16.msra.mxu0 0
    %186 = vmatprep.subr.bf16.mxu0 0
    %187 = vmatpush1.bf16.msra.mxu0 0
    %188 = vmatprep.subr.bf16.mxu0 0
    %189 = vmatpush1.bf16.msra.mxu0 0
    %190 = vmatprep.subr.bf16.mxu0 0
    %191 = vmatpush1.bf16.msra.mxu0 0
    %192 = vmatprep.subr.bf16.mxu0 0
    %193 = vmatpush1.bf16.msra.mxu0 0
    %194 = vmatprep.subr.bf16.mxu0 0
    %195 = vmatpush1.bf16.msra.mxu0 0
    %196 = vmatprep.subr.bf16.mxu0 0
    %197 = vmatpush1.bf16.msra.mxu0 0
    %198 = vmatprep.subr.bf16.mxu0 0
    %199 = vmatpush1.bf16.msra.mxu0 0
    %200 = vmatprep.mubr.bf16.mxu0 0
    %201 = vmatmul.mubr.bf16.gmra.mrb[0].mxu0 %v123
    %v202 = vpop.f32.mrb[0].mxu0
    %v203 = vadd.f32 %v96, %v202
    %v204 = vpop.f32.mrb[0].mxu0
    %v205 = vpop.f32.mrb[0].mxu0
    %v206 = vadd.f32 %v96, %v205
    %v207 = vpop.f32.mrb[0].mxu0
    %208 = vdwg.mxu0
    %v209 = vtanh.pop %v160
    %v210 = vtanh.pop %v162
    %v211 = vtanh.pop %v203
    %v212 = vtanh.pop %v164
    %v213 = vtanh.pop %v166
    %v214 = vtanh.pop %v206
    %v215 = vpack.c.bf16 %v212, %v209
    %v216 = vpack.c.bf16 %v213, %v210
    %v217 = vpack.c.bf16 %v214, %v211
    %v218 = vld [vmem:[#allocation7] sm:$0xf]
    %v219 = vld [vmem:[#allocation7 + $0x8] sm:$0xf]
    %v220 = vld [vmem:[#allocation7 + $0x10] sm:$0xf]
    %v221 = vld [vmem:[#allocation7 + $0x18] sm:$0xf]
    %v222 = vld [vmem:[#allocation7 + $0x20] sm:$0xf]
    %v223 = vld [vmem:[#allocation7 + $0x28] sm:$0xf]
    %v224 = vld [vmem:[#allocation7 + $0x30] sm:$0xf]
    %v225 = vld [vmem:[#allocation7 + $0x38] sm:$0xf]
    %v226 = vld [vmem:[#allocation7 + $0x40] sm:$0xf]
    %v227 = vld [vmem:[#allocation7 + $0x48] sm:$0xf]
    %v228 = vld [vmem:[#allocation7 + $0x50] sm:$0xf]
    %v229 = vld [vmem:[#allocation7 + $0x58] sm:$0xf]
    %v230 = vld [vmem:[#allocation7 + $0x60] sm:$0xf]
    %v231 = vld [vmem:[#allocation7 + $0x68] sm:$0xf]
    %v232 = vld [vmem:[#allocation7 + $0x70] sm:$0xf]
    %v233 = vld [vmem:[#allocation7 + $0x78] sm:$0xf]
    %v234 = vld [vmem:[%s4 + $0x3] sm:$0x1]
    %v236 = vlaneseq
    %v237 = vshrl.u32 %v236, 7
    %v238 = vsub.s32 0, %v237
    %v239 = vrot.slane %v234, %v238
    %v257 = vunpack.c.l.b16 %v218
    %v258 = vunpack.c.l.b16 %v219
    %v259 = vunpack.c.l.b16 %v220
    %v260 = vunpack.c.l.b16 %v221
    %v261 = vunpack.c.l.b16 %v222
    %v262 = vunpack.c.l.b16 %v223
    %v263 = vunpack.c.l.b16 %v224
    %v264 = vunpack.c.l.b16 %v225
    %v265 = vunpack.c.l.b16 %v226
    %v266 = vunpack.c.l.b16 %v227
    %v267 = vunpack.c.l.b16 %v228
    %v268 = vunpack.c.l.b16 %v229
    %v269 = vunpack.c.l.b16 %v230
    %v270 = vunpack.c.l.b16 %v231
    %v271 = vunpack.c.l.b16 %v232
    %v272 = vunpack.c.l.b16 %v233
    %v273 = vpack.c.b16 %v258, %v257
    %v274 = vpack.c.b16 %v260, %v259
    %v275 = vpack.c.b16 %v262, %v261
    %v276 = vpack.c.b16 %v264, %v263
    %v277 = vpack.c.b16 %v266, %v265
    %v278 = vpack.c.b16 %v268, %v267
    %v279 = vpack.c.b16 %v270, %v269
    %v280 = vpack.c.b16 %v272, %v271
    %289 = vmatprep.subr.bf16.mxu0 0
    %290 = vmatpush1.bf16.msra.mxu0 %v273
    %291 = vmatprep.subr.bf16.mxu0 0
    %292 = vmatpush1.bf16.msra.mxu0 %v274
    %293 = vmatprep.subr.bf16.mxu0 0
    %294 = vmatpush1.bf16.msra.mxu0 %v275
    %295 = vmatprep.subr.bf16.mxu0 0
    %296 = vmatpush1.bf16.msra.mxu0 %v276
    %297 = vmatprep.subr.bf16.mxu0 0
    %298 = vmatpush1.bf16.msra.mxu0 %v277
    %299 = vmatprep.subr.bf16.mxu0 0
    %300 = vmatpush1.bf16.msra.mxu0 %v278
    %301 = vmatprep.subr.bf16.mxu0 0
    %302 = vmatpush1.bf16.msra.mxu0 %v279
    %303 = vmatprep.subr.bf16.mxu0 0
    %304 = vmatpush1.bf16.msra.mxu0 %v280
    %305 = vmatprep.subr.bf16.mxu0 0
    %306 = vmatpush1.bf16.msra.mxu0 0
    %307 = vmatprep.subr.bf16.mxu0 0
    %308 = vmatpush1.bf16.msra.mxu0 0
    %309 = vmatprep.subr.bf16.mxu0 0
    %310 = vmatpush1.bf16.msra.mxu0 0
    %311 = vmatprep.subr.bf16.mxu0 0
    %312 = vmatpush1.bf16.msra.mxu0 0
    %313 = vmatprep.subr.bf16.mxu0 0
    %314 = vmatpush1.bf16.msra.mxu0 0
    %315 = vmatprep.subr.bf16.mxu0 0
    %316 = vmatpush1.bf16.msra.mxu0 0
    %317 = vmatprep.subr.bf16.mxu0 0
    %318 = vmatpush1.bf16.msra.mxu0 0
    %319 = vmatprep.subr.bf16.mxu0 0
    %320 = vmatpush1.bf16.msra.mxu0 0
    %321 = vmatprep.mubr.bf16.mxu0 0
    %322 = vmatmul.mubr.bf16.gmra.mrb[0].mxu0 %v217
    %v323 = vpop.f32.mrb[0].mxu0
    %v324 = vadd.f32 %v239, %v323
    %v325 = vpop.f32.mrb[0].mxu0
    %v326 = vpop.f32.mrb[0].mxu0
    %v327 = vadd.f32 %v239, %v326
    %v328 = vpop.f32.mrb[0].mxu0
    %329 = vdwg.mxu0
    %v330 = vtanh.pop %v324
    %v331 = vtanh.pop %v327
    %v332 = vpack.c.bf16 %v331, %v330
    %v333 = vld [vmem:[#allocation7 + $0x4] sm:$0xf]
    %v334 = vld [vmem:[#allocation7 + $0xc] sm:$0xf]
    %v335 = vld [vmem:[#allocation7 + $0x14] sm:$0xf]
    %v336 = vld [vmem:[#allocation7 + $0x1c] sm:$0xf]
    %v337 = vld [vmem:[#allocation7 + $0x24] sm:$0xf]
    %v338 = vld [vmem:[#allocation7 + $0x2c] sm:$0xf]
    %v339 = vld [vmem:[#allocation7 + $0x34] sm:$0xf]
    %v340 = vld [vmem:[#allocation7 + $0x3c] sm:$0xf]
    %v341 = vld [vmem:[#allocation7 + $0x44] sm:$0xf]
    %v342 = vld [vmem:[#allocation7 + $0x4c] sm:$0xf]
    %v343 = vld [vmem:[#allocation7 + $0x54] sm:$0xf]
    %v344 = vld [vmem:[#allocation7 + $0x5c] sm:$0xf]
    %v345 = vld [vmem:[#allocation7 + $0x64] sm:$0xf]
    %v346 = vld [vmem:[#allocation7 + $0x6c] sm:$0xf]
    %v347 = vld [vmem:[#allocation7 + $0x74] sm:$0xf]
    %v348 = vld [vmem:[#allocation7 + $0x7c] sm:$0xf]
    %v349 = vld [vmem:[%s4 + $0x4] sm:$0x1]
    %v351 = vlaneseq
    %v352 = vshrl.u32 %v351, 7
    %v353 = vsub.s32 0, %v352
    %v354 = vrot.slane %v349, %v353
    %v372 = vunpack.c.l.b16 %v333
    %v373 = vunpack.c.l.b16 %v334
    %v374 = vunpack.c.l.b16 %v335
    %v375 = vunpack.c.l.b16 %v336
    %v376 = vunpack.c.l.b16 %v337
    %v377 = vunpack.c.l.b16 %v338
    %v378 = vunpack.c.l.b16 %v339
    %v379 = vunpack.c.l.b16 %v340
    %v380 = vunpack.c.l.b16 %v341
    %v381 = vunpack.c.l.b16 %v342
    %v382 = vunpack.c.l.b16 %v343
    %v383 = vunpack.c.l.b16 %v344
    %v384 = vunpack.c.l.b16 %v345
    %v385 = vunpack.c.l.b16 %v346
    %v386 = vunpack.c.l.b16 %v347
    %v387 = vunpack.c.l.b16 %v348
    %v388 = vpack.c.b16 %v373, %v372
    %v389 = vpack.c.b16 %v375, %v374
    %v390 = vpack.c.b16 %v377, %v376
    %v391 = vpack.c.b16 %v379, %v378
    %v392 = vpack.c.b16 %v381, %v380
    %v393 = vpack.c.b16 %v383, %v382
    %v394 = vpack.c.b16 %v385, %v384
    %v395 = vpack.c.b16 %v387, %v386
    %404 = vmatprep.subr.bf16.mxu0 0
    %405 = vmatpush1.bf16.msra.mxu0 %v388
    %406 = vmatprep.subr.bf16.mxu0 0
    %407 = vmatpush1.bf16.msra.mxu0 %v389
    %408 = vmatprep.subr.bf16.mxu0 0
    %409 = vmatpush1.bf16.msra.mxu0 %v390
    %410 = vmatprep.subr.bf16.mxu0 0
    %411 = vmatpush1.bf16.msra.mxu0 %v391
    %412 = vmatprep.subr.bf16.mxu0 0
    %413 = vmatpush1.bf16.msra.mxu0 %v392
    %414 = vmatprep.subr.bf16.mxu0 0
    %415 = vmatpush1.bf16.msra.mxu0 %v393
    %416 = vmatprep.subr.bf16.mxu0 0
    %417 = vmatpush1.bf16.msra.mxu0 %v394
    %418 = vmatprep.subr.bf16.mxu0 0
    %419 = vmatpush1.bf16.msra.mxu0 %v395
    %420 = vmatprep.subr.bf16.mxu0 0
    %421 = vmatpush1.bf16.msra.mxu0 0
    %422 = vmatprep.subr.bf16.mxu0 0
    %423 = vmatpush1.bf16.msra.mxu0 0
    %424 = vmatprep.subr.bf16.mxu0 0
    %425 = vmatpush1.bf16.msra.mxu0 0
    %426 = vmatprep.subr.bf16.mxu0 0
    %427 = vmatpush1.bf16.msra.mxu0 0
    %428 = vmatprep.subr.bf16.mxu0 0
    %429 = vmatpush1.bf16.msra.mxu0 0
    %430 = vmatprep.subr.bf16.mxu0 0
    %431 = vmatpush1.bf16.msra.mxu0 0
    %432 = vmatprep.subr.bf16.mxu0 0
    %433 = vmatpush1.bf16.msra.mxu0 0
    %434 = vmatprep.subr.bf16.mxu0 0
    %435 = vmatpush1.bf16.msra.mxu0 0
    %436 = vmatprep.mubr.bf16.mxu0 0
    %437 = vmatmul.mubr.bf16.gmra.mrb[0].mxu0 %v332
    %v438 = vpop.f32.mrb[0].mxu0
    %v439 = vadd.f32 %v354, %v438
    %v440 = vpop.f32.mrb[0].mxu0
    %v441 = vpop.f32.mrb[0].mxu0
    %v442 = vadd.f32 %v354, %v441
    %v443 = vpop.f32.mrb[0].mxu0
    %444 = vdwg.mxu0
    %v445 = vld [vmem:[#allocation8] sm:$0xff]
    %v446 = vld [vmem:[#allocation8 + $0x14] sm:$0xff]
    %v447 = vld [vmem:[#allocation8 + $0x28] sm:$0xff]
    %v448 = vld [vmem:[#allocation8 + $0x3c] sm:$0xff]
    %v449 = vld [vmem:[#allocation8 + $0x50] sm:$0xff]
    %v450 = vld [vmem:[#allocation8 + $0x64] sm:$0xff]
    %v451 = vld [vmem:[#allocation8 + $0x78] sm:$0xff]
    %v452 = vld [vmem:[#allocation8 + $0x8c] sm:$0xff]
    %v453 = vld [vmem:[#allocation8 + $0xa0] sm:$0xff]
    %v454 = vld [vmem:[#allocation8 + $0xb4] sm:$0xff]
    %v455 = vld [vmem:[#allocation8 + $0xc8] sm:$0xff]
    %v456 = vld [vmem:[#allocation8 + $0xdc] sm:$0xff]
    %v457 = vld [vmem:[#allocation8 + $0xf0] sm:$0xff]
    %v458 = vld [vmem:[#allocation8 + $0x104] sm:$0xff]
    %v459 = vld [vmem:[#allocation8 + $0x118] sm:$0xff]
    %v460 = vld [vmem:[#allocation8 + $0x12c] sm:$0xff]
    %v461 = vld [vmem:[#allocation8 + $0x140] sm:$0xff]
    %v462 = vld [vmem:[#allocation8 + $0x154] sm:$0xff]
    %v463 = vld [vmem:[#allocation8 + $0x168] sm:$0xff]
    %v464 = vld [vmem:[#allocation8 + $0x17c] sm:$0xff]
    %v465 = vld [vmem:[#allocation8 + $0x190] sm:$0xff]
    %v466 = vld [vmem:[#allocation8 + $0x1a4] sm:$0xff]
    %v467 = vld [vmem:[#allocation8 + $0x1b8] sm:$0xff]
    %v468 = vld [vmem:[#allocation8 + $0x1cc] sm:$0xff]
    %v469 = vld [vmem:[#allocation8 + $0x1e0] sm:$0xff]
    %v470 = vld [vmem:[#allocation8 + $0x1f4] sm:$0xff]
    %v471 = vld [vmem:[#allocation8 + $0x208] sm:$0xff]
    %v472 = vld [vmem:[#allocation8 + $0x21c] sm:$0xff]
    %v473 = vld [vmem:[#allocation8 + $0x230] sm:$0xff]
    %v474 = vld [vmem:[#allocation8 + $0x244] sm:$0xff]
    %v475 = vld [vmem:[#allocation8 + $0x258] sm:$0xff]
    %v476 = vld [vmem:[#allocation8 + $0x26c] sm:$0xff]
    %v477 = vld [vmem:[%s4 + $0x5] sm:$0x3]
    %v479 = vlaneseq
    %v480 = vshrl.u32 %v479, 7
    %v481 = vsub.s32 0, %v480
    %v482 = vrot.slane %v477, %v481
    %v483 = vlaneseq
    %v484 = vshrl.u32 %v483, 7
    %v485 = vsub.s32 1, %v484
    %v486 = vrot.slane %v477, %v485
    %v521 = vunpack.c.l.b16 %v445
    %v522 = vunpack.c.h.b16 %v445
    %v523 = vunpack.c.l.b16 %v446
    %v524 = vunpack.c.h.b16 %v446
    %v525 = vunpack.c.l.b16 %v447
    %v526 = vunpack.c.h.b16 %v447
    %v527 = vunpack.c.l.b16 %v448
    %v528 = vunpack.c.h.b16 %v448
    %v529 = vunpack.c.l.b16 %v449
    %v530 = vunpack.c.h.b16 %v449
    %v531 = vunpack.c.l.b16 %v450
    %v532 = vunpack.c.h.b16 %v450
    %v533 = vunpack.c.l.b16 %v451
    %v534 = vunpack.c.h.b16 %v451
    %v535 = vunpack.c.l.b16 %v452
    %v536 = vunpack.c.h.b16 %v452
    %v537 = vunpack.c.l.b16 %v453
    %v538 = vunpack.c.h.b16 %v453
    %v539 = vunpack.c.l.b16 %v454
    %v540 = vunpack.c.h.b16 %v454
    %v541 = vunpack.c.l.b16 %v455
    %v542 = vunpack.c.h.b16 %v455
    %v543 = vunpack.c.l.b16 %v456
    %v544 = vunpack.c.h.b16 %v456
    %v545 = vunpack.c.l.b16 %v457
    %v546 = vunpack.c.h.b16 %v457
    %v547 = vunpack.c.l.b16 %v458
    %v548 = vunpack.c.h.b16 %v458
    %v549 = vunpack.c.l.b16 %v459
    %v550 = vunpack.c.h.b16 %v459
    %v551 = vunpack.c.l.b16 %v460
    %v552 = vunpack.c.h.b16 %v460
    %v553 = vunpack.c.l.b16 %v461
    %v554 = vunpack.c.h.b16 %v461
    %v555 = vunpack.c.l.b16 %v462
    %v556 = vunpack.c.h.b16 %v462
    %v557 = vunpack.c.l.b16 %v463
    %v558 = vunpack.c.h.b16 %v463
    %v559 = vunpack.c.l.b16 %v464
    %v560 = vunpack.c.h.b16 %v464
    %v561 = vunpack.c.l.b16 %v465
    %v562 = vunpack.c.h.b16 %v465
    %v563 = vunpack.c.l.b16 %v466
    %v564 = vunpack.c.h.b16 %v466
    %v565 = vunpack.c.l.b16 %v467
    %v566 = vunpack.c.h.b16 %v467
    %v567 = vunpack.c.l.b16 %v468
    %v568 = vunpack.c.h.b16 %v468
    %v569 = vunpack.c.l.b16 %v469
    %v570 = vunpack.c.h.b16 %v469
    %v571 = vunpack.c.l.b16 %v470
    %v572 = vunpack.c.h.b16 %v470
    %v573 = vunpack.c.l.b16 %v471
    %v574 = vunpack.c.h.b16 %v471
    %v575 = vunpack.c.l.b16 %v472
    %v576 = vunpack.c.h.b16 %v472
    %v577 = vunpack.c.l.b16 %v473
    %v578 = vunpack.c.h.b16 %v473
    %v579 = vunpack.c.l.b16 %v474
    %v580 = vunpack.c.h.b16 %v474
    %v581 = vunpack.c.l.b16 %v475
    %v582 = vunpack.c.h.b16 %v475
    %v583 = vunpack.c.l.b16 %v476
    %v584 = vunpack.c.h.b16 %v476
    %v585 = vpack.c.b16 %v523, %v521
    %v586 = vpack.c.b16 %v524, %v522
    %v587 = vpack.c.b16 %v527, %v525
    %v588 = vpack.c.b16 %v528, %v526
    %v589 = vpack.c.b16 %v531, %v529
    %v590 = vpack.c.b16 %v532, %v530
    %v591 = vpack.c.b16 %v535, %v533
    %v592 = vpack.c.b16 %v536, %v534
    %v593 = vpack.c.b16 %v539, %v537
    %v594 = vpack.c.b16 %v540, %v538
    %v595 = vpack.c.b16 %v543, %v541
    %v596 = vpack.c.b16 %v544, %v542
    %v597 = vpack.c.b16 %v547, %v545
    %v598 = vpack.c.b16 %v548, %v546
    %v599 = vpack.c.b16 %v551, %v549
    %v600 = vpack.c.b16 %v552, %v550
    %v601 = vpack.c.b16 %v555, %v553
    %v602 = vpack.c.b16 %v556, %v554
    %v603 = vpack.c.b16 %v559, %v557
    %v604 = vpack.c.b16 %v560, %v558
    %v605 = vpack.c.b16 %v563, %v561
    %v606 = vpack.c.b16 %v564, %v562
    %v607 = vpack.c.b16 %v567, %v565
    %v608 = vpack.c.b16 %v568, %v566
    %v609 = vpack.c.b16 %v571, %v569
    %v610 = vpack.c.b16 %v572, %v570
    %v611 = vpack.c.b16 %v575, %v573
    %v612 = vpack.c.b16 %v576, %v574
    %v613 = vpack.c.b16 %v579, %v577
    %v614 = vpack.c.b16 %v580, %v578
    %v615 = vpack.c.b16 %v583, %v581
    %v616 = vpack.c.b16 %v584, %v582
    %649 = vmatprep.subr.bf16.mxu0 %v586
    %650 = vmatpush1.bf16.msra.mxu0 %v585
    %651 = vmatprep.subr.bf16.mxu0 %v588
    %652 = vmatpush1.bf16.msra.mxu0 %v587
    %653 = vmatprep.subr.bf16.mxu0 %v590
    %654 = vmatpush1.bf16.msra.mxu0 %v589
    %655 = vmatprep.subr.bf16.mxu0 %v592
    %656 = vmatpush1.bf16.msra.mxu0 %v591
    %657 = vmatprep.subr.bf16.mxu0 %v594
    %658 = vmatpush1.bf16.msra.mxu0 %v593
    %659 = vmatprep.subr.bf16.mxu0 %v596
    %660 = vmatpush1.bf16.msra.mxu0 %v595
    %661 = vmatprep.subr.bf16.mxu0 %v598
    %662 = vmatpush1.bf16.msra.mxu0 %v597
    %663 = vmatprep.subr.bf16.mxu0 %v600
    %664 = vmatpush1.bf16.msra.mxu0 %v599
    %665 = vmatprep.subr.bf16.mxu0 %v602
    %666 = vmatpush1.bf16.msra.mxu0 %v601
    %667 = vmatprep.subr.bf16.mxu0 %v604
    %668 = vmatpush1.bf16.msra.mxu0 %v603
    %669 = vmatprep.subr.bf16.mxu0 %v606
    %670 = vmatpush1.bf16.msra.mxu0 %v605
    %671 = vmatprep.subr.bf16.mxu0 %v608
    %672 = vmatpush1.bf16.msra.mxu0 %v607
    %673 = vmatprep.subr.bf16.mxu0 %v610
    %674 = vmatpush1.bf16.msra.mxu0 %v609
    %675 = vmatprep.subr.bf16.mxu0 %v612
    %676 = vmatpush1.bf16.msra.mxu0 %v611
    %677 = vmatprep.subr.bf16.mxu0 %v614
    %678 = vmatpush1.bf16.msra.mxu0 %v613
    %679 = vmatprep.subr.bf16.mxu0 %v616
    %680 = vmatpush1.bf16.msra.mxu0 %v615
    %681 = vmatprep.mubr.bf16.mxu0 %v216
    %682 = vmatmul.mubr.bf16.gmra.mrb[0].mxu0 %v215
    %v683 = vpop.f32.mrb[0].mxu0
    %v684 = vadd.f32 %v482, %v683
    %v685 = vpop.f32.mrb[0].mxu0
    %v686 = vadd.f32 %v486, %v685
    %v687 = vpop.f32.mrb[0].mxu0
    %v688 = vadd.f32 %v482, %v687
    %v689 = vpop.f32.mrb[0].mxu0
    %v690 = vadd.f32 %v486, %v689
    %691 = vdwg.mxu0
    %v692 = vtanh.pop %v684
    %v693 = vtanh.pop %v686
    %v694 = vtanh.pop %v688
    %v695 = vtanh.pop %v690
    %v696 = vpack.c.bf16 %v694, %v692
    %v697 = vpack.c.bf16 %v695, %v693
    %v698 = vld [vmem:[#allocation8 + $0x8] sm:$0xff]
    %v699 = vld [vmem:[#allocation8 + $0x1c] sm:$0xff]
    %v700 = vld [vmem:[#allocation8 + $0x30] sm:$0xff]
    %v701 = vld [vmem:[#allocation8 + $0x44] sm:$0xff]
    %v702 = vld [vmem:[#allocation8 + $0x58] sm:$0xff]
    %v703 = vld [vmem:[#allocation8 + $0x6c] sm:$0xff]
    %v704 = vld [vmem:[#allocation8 + $0x80] sm:$0xff]
    %v705 = vld [vmem:[#allocation8 + $0x94] sm:$0xff]
    %v706 = vld [vmem:[#allocation8 + $0xa8] sm:$0xff]
    %v707 = vld [vmem:[#allocation8 + $0xbc] sm:$0xff]
    %v708 = vld [vmem:[#allocation8 + $0xd0] sm:$0xff]
    %v709 = vld [vmem:[#allocation8 + $0xe4] sm:$0xff]
    %v710 = vld [vmem:[#allocation8 + $0xf8] sm:$0xff]
    %v711 = vld [vmem:[#allocation8 + $0x10c] sm:$0xff]
    %v712 = vld [vmem:[#allocation8 + $0x120] sm:$0xff]
    %v713 = vld [vmem:[#allocation8 + $0x134] sm:$0xff]
    %v714 = vld [vmem:[#allocation8 + $0x148] sm:$0xff]
    %v715 = vld [vmem:[#allocation8 + $0x15c] sm:$0xff]
    %v716 = vld [vmem:[#allocation8 + $0x170] sm:$0xff]
    %v717 = vld [vmem:[#allocation8 + $0x184] sm:$0xff]
    %v718 = vld [vmem:[#allocation8 + $0x198] sm:$0xff]
    %v719 = vld [vmem:[#allocation8 + $0x1ac] sm:$0xff]
    %v720 = vld [vmem:[#allocation8 + $0x1c0] sm:$0xff]
    %v721 = vld [vmem:[#allocation8 + $0x1d4] sm:$0xff]
    %v722 = vld [vmem:[#allocation8 + $0x1e8] sm:$0xff]
    %v723 = vld [vmem:[#allocation8 + $0x1fc] sm:$0xff]
    %v724 = vld [vmem:[#allocation8 + $0x210] sm:$0xff]
    %v725 = vld [vmem:[#allocation8 + $0x224] sm:$0xff]
    %v726 = vld [vmem:[#allocation8 + $0x238] sm:$0xff]
    %v727 = vld [vmem:[#allocation8 + $0x24c] sm:$0xff]
    %v728 = vld [vmem:[#allocation8 + $0x260] sm:$0xff]
    %v729 = vld [vmem:[#allocation8 + $0x274] sm:$0xff]
    %v730 = vld [vmem:[%s4 + $0x7] sm:$0x3]
    %v732 = vlaneseq
    %v733 = vshrl.u32 %v732, 7
    %v734 = vsub.s32 0, %v733
    %v735 = vrot.slane %v730, %v734
    %v736 = vlaneseq
    %v737 = vshrl.u32 %v736, 7
    %v738 = vsub.s32 1, %v737
    %v739 = vrot.slane %v730, %v738
    %v774 = vunpack.c.l.b16 %v698
    %v775 = vunpack.c.h.b16 %v698
    %v776 = vunpack.c.l.b16 %v699
    %v777 = vunpack.c.h.b16 %v699
    %v778 = vunpack.c.l.b16 %v700
    %v779 = vunpack.c.h.b16 %v700
    %v780 = vunpack.c.l.b16 %v701
    %v781 = vunpack.c.h.b16 %v701
    %v782 = vunpack.c.l.b16 %v702
    %v783 = vunpack.c.h.b16 %v702
    %v784 = vunpack.c.l.b16 %v703
    %v785 = vunpack.c.h.b16 %v703
    %v786 = vunpack.c.l.b16 %v704
    %v787 = vunpack.c.h.b16 %v704
    %v788 = vunpack.c.l.b16 %v705
    %v789 = vunpack.c.h.b16 %v705
    %v790 = vunpack.c.l.b16 %v706
    %v791 = vunpack.c.h.b16 %v706
    %v792 = vunpack.c.l.b16 %v707
    %v793 = vunpack.c.h.b16 %v707
    %v794 = vunpack.c.l.b16 %v708
    %v795 = vunpack.c.h.b16 %v708
    %v796 = vunpack.c.l.b16 %v709
    %v797 = vunpack.c.h.b16 %v709
    %v798 = vunpack.c.l.b16 %v710
    %v799 = vunpack.c.h.b16 %v710
    %v800 = vunpack.c.l.b16 %v711
    %v801 = vunpack.c.h.b16 %v711
    %v802 = vunpack.c.l.b16 %v712
    %v803 = vunpack.c.h.b16 %v712
    %v804 = vunpack.c.l.b16 %v713
    %v805 = vunpack.c.h.b16 %v713
    %v806 = vunpack.c.l.b16 %v714
    %v807 = vunpack.c.h.b16 %v714
    %v808 = vunpack.c.l.b16 %v715
    %v809 = vunpack.c.h.b16 %v715
    %v810 = vunpack.c.l.b16 %v716
    %v811 = vunpack.c.h.b16 %v716
    %v812 = vunpack.c.l.b16 %v717
    %v813 = vunpack.c.h.b16 %v717
    %v814 = vunpack.c.l.b16 %v718
    %v815 = vunpack.c.h.b16 %v718
    %v816 = vunpack.c.l.b16 %v719
    %v817 = vunpack.c.h.b16 %v719
    %v818 = vunpack.c.l.b16 %v720
    %v819 = vunpack.c.h.b16 %v720
    %v820 = vunpack.c.l.b16 %v721
    %v821 = vunpack.c.h.b16 %v721
    %v822 = vunpack.c.l.b16 %v722
    %v823 = vunpack.c.h.b16 %v722
    %v824 = vunpack.c.l.b16 %v723
    %v825 = vunpack.c.h.b16 %v723
    %v826 = vunpack.c.l.b16 %v724
    %v827 = vunpack.c.h.b16 %v724
    %v828 = vunpack.c.l.b16 %v725
    %v829 = vunpack.c.h.b16 %v725
    %v830 = vunpack.c.l.b16 %v726
    %v831 = vunpack.c.h.b16 %v726
    %v832 = vunpack.c.l.b16 %v727
    %v833 = vunpack.c.h.b16 %v727
    %v834 = vunpack.c.l.b16 %v728
    %v835 = vunpack.c.h.b16 %v728
    %v836 = vunpack.c.l.b16 %v729
    %v837 = vunpack.c.h.b16 %v729
    %v838 = vpack.c.b16 %v776, %v774
    %v839 = vpack.c.b16 %v777, %v775
    %v840 = vpack.c.b16 %v780, %v778
    %v841 = vpack.c.b16 %v781, %v779
    %v842 = vpack.c.b16 %v784, %v782
    %v843 = vpack.c.b16 %v785, %v783
    %v844 = vpack.c.b16 %v788, %v786
    %v845 = vpack.c.b16 %v789, %v787
    %v846 = vpack.c.b16 %v792, %v790
    %v847 = vpack.c.b16 %v793, %v791
    %v848 = vpack.c.b16 %v796, %v794
    %v849 = vpack.c.b16 %v797, %v795
    %v850 = vpack.c.b16 %v800, %v798
    %v851 = vpack.c.b16 %v801, %v799
    %v852 = vpack.c.b16 %v804, %v802
    %v853 = vpack.c.b16 %v805, %v803
    %v854 = vpack.c.b16 %v808, %v806
    %v855 = vpack.c.b16 %v809, %v807
    %v856 = vpack.c.b16 %v812, %v810
    %v857 = vpack.c.b16 %v813, %v811
    %v858 = vpack.c.b16 %v816, %v814
    %v859 = vpack.c.b16 %v817, %v815
    %v860 = vpack.c.b16 %v820, %v818
    %v861 = vpack.c.b16 %v821, %v819
    %v862 = vpack.c.b16 %v824, %v822
    %v863 = vpack.c.b16 %v825, %v823
    %v864 = vpack.c.b16 %v828, %v826
    %v865 = vpack.c.b16 %v829, %v827
    %v866 = vpack.c.b16 %v832, %v830
    %v867 = vpack.c.b16 %v833, %v831
    %v868 = vpack.c.b16 %v836, %v834
    %v869 = vpack.c.b16 %v837, %v835
    %902 = vmatprep.subr.bf16.mxu0 %v839
    %903 = vmatpush1.bf16.msra.mxu0 %v838
    %904 = vmatprep.subr.bf16.mxu0 %v841
    %905 = vmatpush1.bf16.msra.mxu0 %v840
    %906 = vmatprep.subr.bf16.mxu0 %v843
    %907 = vmatpush1.bf16.msra.mxu0 %v842
    %908 = vmatprep.subr.bf16.mxu0 %v845
    %909 = vmatpush1.bf16.msra.mxu0 %v844
    %910 = vmatprep.subr.bf16.mxu0 %v847
    %911 = vmatpush1.bf16.msra.mxu0 %v846
    %912 = vmatprep.subr.bf16.mxu0 %v849
    %913 = vmatpush1.bf16.msra.mxu0 %v848
    %914 = vmatprep.subr.bf16.mxu0 %v851
    %915 = vmatpush1.bf16.msra.mxu0 %v850
    %916 = vmatprep.subr.bf16.mxu0 %v853
    %917 = vmatpush1.bf16.msra.mxu0 %v852
    %918 = vmatprep.subr.bf16.mxu0 %v855
    %919 = vmatpush1.bf16.msra.mxu0 %v854
    %920 = vmatprep.subr.bf16.mxu0 %v857
    %921 = vmatpush1.bf16.msra.mxu0 %v856
    %922 = vmatprep.subr.bf16.mxu0 %v859
    %923 = vmatpush1.bf16.msra.mxu0 %v858
    %924 = vmatprep.subr.bf16.mxu0 %v861
    %925 = vmatpush1.bf16.msra.mxu0 %v860
    %926 = vmatprep.subr.bf16.mxu0 %v863
    %927 = vmatpush1.bf16.msra.mxu0 %v862
    %928 = vmatprep.subr.bf16.mxu0 %v865
    %929 = vmatpush1.bf16.msra.mxu0 %v864
    %930 = vmatprep.subr.bf16.mxu0 %v867
    %931 = vmatpush1.bf16.msra.mxu0 %v866
    %932 = vmatprep.subr.bf16.mxu0 %v869
    %933 = vmatpush1.bf16.msra.mxu0 %v868
    %934 = vmatprep.mubr.bf16.mxu0 %v697
    %935 = vmatmul.mubr.bf16.gmra.mrb[0].mxu0 %v696
    %v936 = vpop.f32.mrb[0].mxu0
    %v937 = vadd.f32 %v735, %v936
    %v938 = vpop.f32.mrb[0].mxu0
    %v939 = vadd.f32 %v739, %v938
    %v940 = vpop.f32.mrb[0].mxu0
    %v941 = vadd.f32 %v735, %v940
    %v942 = vpop.f32.mrb[0].mxu0
    %v943 = vadd.f32 %v739, %v942
    %944 = vdwg.mxu0
    %v945 = vtanh.pop %v937
    %v946 = vtanh.pop %v939
    %v947 = vtanh.pop %v941
    %v948 = vtanh.pop %v943
    %v949 = vpack.c.bf16 %v947, %v945
    %v950 = vpack.c.bf16 %v948, %v946
    %v951 = vld [vmem:[#allocation8 + $0x10] sm:$0xf]
    %v952 = vld [vmem:[#allocation8 + $0x24] sm:$0xf]
    %v953 = vld [vmem:[#allocation8 + $0x38] sm:$0xf]
    %v954 = vld [vmem:[#allocation8 + $0x4c] sm:$0xf]
    %v955 = vld [vmem:[#allocation8 + $0x60] sm:$0xf]
    %v956 = vld [vmem:[#allocation8 + $0x74] sm:$0xf]
    %v957 = vld [vmem:[#allocation8 + $0x88] sm:$0xf]
    %v958 = vld [vmem:[#allocation8 + $0x9c] sm:$0xf]
    %v959 = vld [vmem:[#allocation8 + $0xb0] sm:$0xf]
    %v960 = vld [vmem:[#allocation8 + $0xc4] sm:$0xf]
    %v961 = vld [vmem:[#allocation8 + $0xd8] sm:$0xf]
    %v962 = vld [vmem:[#allocation8 + $0xec] sm:$0xf]
    %v963 = vld [vmem:[#allocation8 + $0x100] sm:$0xf]
    %v964 = vld [vmem:[#allocation8 + $0x114] sm:$0xf]
    %v965 = vld [vmem:[#allocation8 + $0x128] sm:$0xf]
    %v966 = vld [vmem:[#allocation8 + $0x13c] sm:$0xf]
    %v967 = vld [vmem:[#allocation8 + $0x150] sm:$0xf]
    %v968 = vld [vmem:[#allocation8 + $0x164] sm:$0xf]
    %v969 = vld [vmem:[#allocation8 + $0x178] sm:$0xf]
    %v970 = vld [vmem:[#allocation8 + $0x18c] sm:$0xf]
    %v971 = vld [vmem:[#allocation8 + $0x1a0] sm:$0xf]
    %v972 = vld [vmem:[#allocation8 + $0x1b4] sm:$0xf]
    %v973 = vld [vmem:[#allocation8 + $0x1c8] sm:$0xf]
    %v974 = vld [vmem:[#allocation8 + $0x1dc] sm:$0xf]
    %v975 = vld [vmem:[#allocation8 + $0x1f0] sm:$0xf]
    %v976 = vld [vmem:[#allocation8 + $0x204] sm:$0xf]
    %v977 = vld [vmem:[#allocation8 + $0x218] sm:$0xf]
    %v978 = vld [vmem:[#allocation8 + $0x22c] sm:$0xf]
    %v979 = vld [vmem:[#allocation8 + $0x240] sm:$0xf]
    %v980 = vld [vmem:[#allocation8 + $0x254] sm:$0xf]
    %v981 = vld [vmem:[#allocation8 + $0x268] sm:$0xf]
    %v982 = vld [vmem:[#allocation8 + $0x27c] sm:$0xf]
    %v983 = vld [vmem:[%s4 + $0x9] sm:$0x1]
    %v985 = vlaneseq
    %v986 = vshrl.u32 %v985, 7
    %v987 = vsub.s32 0, %v986
    %v988 = vrot.slane %v983, %v987
    %v1022 = vunpack.c.l.b16 %v951
    %v1023 = vunpack.c.l.b16 %v952
    %v1024 = vunpack.c.l.b16 %v953
    %v1025 = vunpack.c.l.b16 %v954
    %v1026 = vunpack.c.l.b16 %v955
    %v1027 = vunpack.c.l.b16 %v956
    %v1028 = vunpack.c.l.b16 %v957
    %v1029 = vunpack.c.l.b16 %v958
    %v1030 = vunpack.c.l.b16 %v959
    %v1031 = vunpack.c.l.b16 %v960
    %v1032 = vunpack.c.l.b16 %v961
    %v1033 = vunpack.c.l.b16 %v962
    %v1034 = vunpack.c.l.b16 %v963
    %v1035 = vunpack.c.l.b16 %v964
    %v1036 = vunpack.c.l.b16 %v965
    %v1037 = vunpack.c.l.b16 %v966
    %v1038 = vunpack.c.l.b16 %v967
    %v1039 = vunpack.c.l.b16 %v968
    %v1040 = vunpack.c.l.b16 %v969
    %v1041 = vunpack.c.l.b16 %v970
    %v1042 = vunpack.c.l.b16 %v971
    %v1043 = vunpack.c.l.b16 %v972
    %v1044 = vunpack.c.l.b16 %v973
    %v1045 = vunpack.c.l.b16 %v974
    %v1046 = vunpack.c.l.b16 %v975
    %v1047 = vunpack.c.l.b16 %v976
    %v1048 = vunpack.c.l.b16 %v977
    %v1049 = vunpack.c.l.b16 %v978
    %v1050 = vunpack.c.l.b16 %v979
    %v1051 = vunpack.c.l.b16 %v980
    %v1052 = vunpack.c.l.b16 %v981
    %v1053 = vunpack.c.l.b16 %v982
    %v1054 = vpack.c.b16 %v1023, %v1022
    %v1055 = vpack.c.b16 %v1025, %v1024
    %v1056 = vpack.c.b16 %v1027, %v1026
    %v1057 = vpack.c.b16 %v1029, %v1028
    %v1058 = vpack.c.b16 %v1031, %v1030
    %v1059 = vpack.c.b16 %v1033, %v1032
    %v1060 = vpack.c.b16 %v1035, %v1034
    %v1061 = vpack.c.b16 %v1037, %v1036
    %v1062 = vpack.c.b16 %v1039, %v1038
    %v1063 = vpack.c.b16 %v1041, %v1040
    %v1064 = vpack.c.b16 %v1043, %v1042
    %v1065 = vpack.c.b16 %v1045, %v1044
    %v1066 = vpack.c.b16 %v1047, %v1046
    %v1067 = vpack.c.b16 %v1049, %v1048
    %v1068 = vpack.c.b16 %v1051, %v1050
    %v1069 = vpack.c.b16 %v1053, %v1052
    %1086 = vmatprep.subr.bf16.mxu0 0
    %1087 = vmatpush1.bf16.msra.mxu0 %v1054
    %1088 = vmatprep.subr.bf16.mxu0 0
    %1089 = vmatpush1.bf16.msra.mxu0 %v1055
    %1090 = vmatprep.subr.bf16.mxu0 0
    %1091 = vmatpush1.bf16.msra.mxu0 %v1056
    %1092 = vmatprep.subr.bf16.mxu0 0
    %1093 = vmatpush1.bf16.msra.mxu0 %v1057
    %1094 = vmatprep.subr.bf16.mxu0 0
    %1095 = vmatpush1.bf16.msra.mxu0 %v1058
    %1096 = vmatprep.subr.bf16.mxu0 0
    %1097 = vmatpush1.bf16.msra.mxu0 %v1059
    %1098 = vmatprep.subr.bf16.mxu0 0
    %1099 = vmatpush1.bf16.msra.mxu0 %v1060
    %1100 = vmatprep.subr.bf16.mxu0 0
    %1101 = vmatpush1.bf16.msra.mxu0 %v1061
    %1102 = vmatprep.subr.bf16.mxu0 0
    %1103 = vmatpush1.bf16.msra.mxu0 %v1062
    %1104 = vmatprep.subr.bf16.mxu0 0
    %1105 = vmatpush1.bf16.msra.mxu0 %v1063
    %1106 = vmatprep.subr.bf16.mxu0 0
    %1107 = vmatpush1.bf16.msra.mxu0 %v1064
    %1108 = vmatprep.subr.bf16.mxu0 0
    %1109 = vmatpush1.bf16.msra.mxu0 %v1065
    %1110 = vmatprep.subr.bf16.mxu0 0
    %1111 = vmatpush1.bf16.msra.mxu0 %v1066
    %1112 = vmatprep.subr.bf16.mxu0 0
    %1113 = vmatpush1.bf16.msra.mxu0 %v1067
    %1114 = vmatprep.subr.bf16.mxu0 0
    %1115 = vmatpush1.bf16.msra.mxu0 %v1068
    %1116 = vmatprep.subr.bf16.mxu0 0
    %1117 = vmatpush1.bf16.msra.mxu0 %v1069
    %1118 = vmatprep.mubr.bf16.mxu0 %v950
    %1119 = vmatmul.mubr.bf16.gmra.mrb[0].mxu0 %v949
    %v1120 = vpop.f32.mrb[0].mxu0
    %v1121 = vadd.f32 %v988, %v1120
    %v1122 = vpop.f32.mrb[0].mxu0
    %v1123 = vpop.f32.mrb[0].mxu0
    %v1124 = vadd.f32 %v988, %v1123
    %v1125 = vpop.f32.mrb[0].mxu0
    %1126 = vdwg.mxu0
    %1127 = vst [vmem:[#allocation10] sm:$0xff] %v439
    %1128 = vst [vmem:[#allocation10 + $0x10] sm:$0xff] %v442
    %1129 = vst [vmem:[#allocation10 + $0x8] sm:$0xff] %v1121
    %1130 = vst [vmem:[#allocation10 + $0x18] sm:$0xff] %v1124
    // Predicated region
    $region38: #{tpu_custom_call.1} parent=1 // pred_check
      _
    $region39: #{tpu_custom_call.1} parent=1 // pred_check_branch
      %1132 = sbr.rel (0) target = $region41
    $region40: #{tpu_custom_call.1} parent=1 // pred_region
      %s1134 = ssub.s32 512, 512
      %1135 = vsyncadd [#allocation4], %s1134
      %s1136 = sshll.u32 [#allocation10], 4
      %s1137 = int_to_ptr.vmem [resolvable:$true] %s1136
      %1142 = dma.vmem_to_hbm [thread:$0]  %s1137, 512, %s5, [#allocation4], 256, 256, 16
    $region41: #{tpu_custom_call.1} parent=1 // pred_fallthru
      _
    // Predicated region
    $region42: #{tpu_custom_call.1} parent=1 // pred_check
      _
    $region43: #{tpu_custom_call.1} parent=1 // pred_check_branch
      %1144 = sbr.rel (0) target = $region45
    $region44: #{tpu_custom_call.1} parent=1 // pred_region
      %1145 = dma.done [#allocation4], 512
    $region45: #{tpu_custom_call.1} parent=1 // pred_fallthru
      _
    %1146 = vsyncpa [#allocation3], 1
    %1147 = vsyncpa [#allocation6], 1
    %1148 = vsyncpa [#allocation9], 1
    %1149 = vsyncpa [#allocation4], 1

// kernel: tpu_custom_call.1
$region0: #{tpu_custom_call.1}
  #allocation0 [shape = 'u32[]', space=smem, size = 0x4, offset = 0x4, fixed_abs, tag = 'smem constant byte address 0x4 - core index']
  #allocation1 [shape = 'u32[144,128]{1,0:T(1,128)}', space=vmem, size = 0x12000, scoped, tag = 'internal scratch']
  %s0 = inlined_call_operand.hbm [shape: bf16[16,16], index: 0, kind: input, shape index: {}]
  %s1 = inlined_call_operand.hbm [shape: bf16[16,384], index: 1, kind: input, shape index: {}]
  %s2 = inlined_call_operand.hbm [shape: bf16[128,256], index: 2, kind: input, shape index: {}]
  %s3 = inlined_call_operand.hbm [shape: bf16[256,640], index: 3, kind: input, shape index: {}]
  %s4 = inlined_call_operand.vmem [shape: f32[1,1280], index: 4, kind: input, shape index: {}]
  %s5 = inlined_call_operand.hbm [shape: f32[16,256], index: 5, kind: output, shape index: {}]
  %s6 = sld [smem:[#allocation0]]
  $region46: #{tpu_custom_call.1} parent=0
    _
  %s8 = ssub.s32 1, %s6
  %s9 = scalar_select 0, %s8, %s6
  $region1: #{tpu_custom_call.1} parent=0
    #allocation2 [shape = 'u8[4096]{0}', space=vmem, size = 0x1000, scoped, tag = 'input window, operand 0, single buffered']
    #allocation3 [shape = 's32[1]{0}', space=sflag, size = 0x4, scoped, tag = 'scoped memory for tpu_custom_call.1']
    #allocation4 [shape = 's32[1]{0}', space=sflag, size = 0x4, scoped, tag = 'scoped memory for tpu_custom_call.1']
    #allocation5 [shape = 'u8[12288]{0}', space=vmem, size = 0x3000, scoped, tag = 'input window, operand 1, single buffered']
    #allocation6 [shape = 's32[1]{0}', space=sflag, size = 0x4, scoped, tag = 'scoped memory for tpu_custom_call.1']
    #allocation7 [shape = 'u8[65536]{0}', space=vmem, size = 0x10000, scoped, tag = 'input window, operand 2, single buffered']
    #allocation8 [shape = 'u8[327680]{0}', space=vmem, size = 0x50000, scoped, tag = 'input window, operand 3, single buffered']
    #allocation9 [shape = 's32[1]{0}', space=sflag, size = 0x4, scoped, tag = 'scoped memory for tpu_custom_call.1']
    #allocation10 [shape = 'u8[16384]{0}', space=vmem, size = 0x4000, scoped, tag = 'output window, operand 0, single buffered']
    %10 = vsyncpa [#allocation3], 0
    %11 = vsyncpa [#allocation6], 0
    %12 = vsyncpa [#allocation9], 0
    %13 = vsyncpa [#allocation4], 0
    // Predicated region
    $region2: #{tpu_custom_call.1} parent=1 // pred_check
      _
    $region3: #{tpu_custom_call.1} parent=1 // pred_check_branch
      %15 = sbr.rel (0) target = $region5
    $region4: #{tpu_custom_call.1} parent=1 // pred_region
      %s17 = ssub.s32 128, 128
      %18 = vsyncadd [#allocation3], %s17
      %s19 = sshll.u32 [#allocation2], 4
      %s20 = int_to_ptr.vmem [resolvable:$true] %s19
      %25 = dma.hbm_to_vmem [thread:$0]  %s0, 128, %s20, [#allocation3], 64, 64, 4
    $region5: #{tpu_custom_call.1} parent=1 // pred_fallthru
      _
    // Predicated region
    $region6: #{tpu_custom_call.1} parent=1 // pred_check
      _
    $region7: #{tpu_custom_call.1} parent=1 // pred_check_branch
      %27 = sbr.rel (0) target = $region9
    $region8: #{tpu_custom_call.1} parent=1 // pred_region
      %s29 = ssub.s32 384, 384
      %30 = vsyncadd [#allocation6], %s29
      %s31 = sshll.u32 [#allocation5], 4
      %s32 = int_to_ptr.vmem [resolvable:$true] %s31
      %37 = dma.hbm_to_vmem [thread:$0]  %s1, 384, %s32, [#allocation6], 192, 192, 12
    $region9: #{tpu_custom_call.1} parent=1 // pred_fallthru
      _
    // Predicated region
    $region10: #{tpu_custom_call.1} parent=1 // pred_check
      _
    $region11: #{tpu_custom_call.1} parent=1 // pred_check_branch
      %39 = sbr.rel (0) target = $region13
    $region12: #{tpu_custom_call.1} parent=1 // pred_region
      %s41 = ssub.s32 2048, 2048
      %42 = vsyncadd [#allocation6], %s41
      %s43 = sshll.u32 [#allocation7], 4
      %s44 = int_to_ptr.vmem [resolvable:$true] %s43
      %49 = dma.hbm_to_vmem [thread:$0]  %s2, 2048, %s44, [#allocation6], 128, 128, 8
    $region13: #{tpu_custom_call.1} parent=1 // pred_fallthru
      _
    // Predicated region
    $region14: #{tpu_custom_call.1} parent=1 // pred_check
      _
    $region15: #{tpu_custom_call.1} parent=1 // pred_check_branch
      %51 = sbr.rel (0) target = $region17
    $region16: #{tpu_custom_call.1} parent=1 // pred_region
      %s53 = ssub.s32 10240, 10240
      %54 = vsyncadd [#allocation9], %s53
      %s55 = sshll.u32 [#allocation8], 4
      %s56 = int_to_ptr.vmem [resolvable:$true] %s55
      %61 = dma.hbm_to_vmem [thread:$0]  %s3, 10240, %s56, [#allocation9], 320, 320, 20
    $region17: #{tpu_custom_call.1} parent=1 // pred_fallthru
      _
    // Predicated region
    $region18: #{tpu_custom_call.1} parent=1 // pred_check
      _
    $region19: #{tpu_custom_call.1} parent=1 // pred_check_branch
      %63 = sbr.rel (0) target = $region21
    $region20: #{tpu_custom_call.1} parent=1 // pred_region
      _
    $region21: #{tpu_custom_call.1} parent=1 // pred_fallthru
      _
    // Predicated region
    $region22: #{tpu_custom_call.1} parent=1 // pred_check
      _
    $region23: #{tpu_custom_call.1} parent=1 // pred_check_branch
      %65 = sbr.rel (0) target = $region25
    $region24: #{tpu_custom_call.1} parent=1 // pred_region
      %66 = dma.done [#allocation3], 128
    $region25: #{tpu_custom_call.1} parent=1 // pred_fallthru
      _
    // Predicated region
    $region26: #{tpu_custom_call.1} parent=1 // pred_check
      _
    $region27: #{tpu_custom_call.1} parent=1 // pred_check_branch
      %68 = sbr.rel (0) target = $region29
    $region28: #{tpu_custom_call.1} parent=1 // pred_region
      %69 = dma.done [#allocation6], 384
    $region29: #{tpu_custom_call.1} parent=1 // pred_fallthru
      _
    // Predicated region
    $region30: #{tpu_custom_call.1} parent=1 // pred_check
      _
    $region31: #{tpu_custom_call.1} parent=1 // pred_check_branch
      %71 = sbr.rel (0) target = $region33
    $region32: #{tpu_custom_call.1} parent=1 // pred_region
      %72 = dma.done [#allocation6], 2048
    $region33: #{tpu_custom_call.1} parent=1 // pred_fallthru
      _
    // Predicated region
    $region34: #{tpu_custom_call.1} parent=1 // pred_check
      _
    $region35: #{tpu_custom_call.1} parent=1 // pred_check_branch
      %74 = sbr.rel (0) target = $region37
    $region36: #{tpu_custom_call.1} parent=1 // pred_region
      %75 = dma.done [#allocation9], 10240
    $region37: #{tpu_custom_call.1} parent=1 // pred_fallthru
      _
    %v77 = vld [vmem:[#allocation2] sm:$0xf]
    %v78 = vld [vmem:[#allocation2 + $0x4] sm:$0xf]
    %v79 = vld [vmem:[#allocation5] sm:$0xff]
    %v80 = vld [vmem:[#allocation5 + $0x8] sm:$0xf]
    %v81 = vld [vmem:[#allocation5 + $0xc] sm:$0xff]
    %v82 = vld [vmem:[#allocation5 + $0x14] sm:$0xf]
    %v83 = vld [vmem:[%s4] sm:$0x7]
    %v85 = vlaneseq
    %v86 = vshrl.u32 %v85, 7
    %v87 = vsub.s32 0, %v86
    %v88 = vrot.slane %v83, %v87
    %v89 = vlaneseq
    %v90 = vshrl.u32 %v89, 7
    %v91 = vsub.s32 1, %v90
    %v92 = vrot.slane %v83, %v91
    %v93 = vlaneseq
    %v94 = vshrl.u32 %v93, 7
    %v95 = vsub.s32 2, %v94
    %v96 = vrot.slane %v83, %v95
    %v102 = vunpack.c.l.b16 %v77
    %v103 = vunpack.c.l.b16 %v78
    %v104 = vpack.c.b16 %v103, %v102
    %v109 = vunpack.c.l.b16 %v79
    %v110 = vunpack.c.h.b16 %v79
    %v111 = vunpack.c.l.b16 %v80
    %v112 = vunpack.c.l.b16 %v81
    %v113 = vunpack.c.h.b16 %v81
    %v114 = vunpack.c.l.b16 %v82
    %v115 = vpack.c.b16 %v112, %v109
    %v116 = vpack.c.b16 %v113, %v110
    %v117 = vpack.c.b16 %v114, %v111
    %vm121 = vcmask 130048
    %v123 = vsel %vm121, %v104, 0
    %125 = vmatprep.subr.bf16.mxu0 %v116
    %126 = vmatpush1.bf16.msra.mxu0 %v115
    %127 = vmatprep.subr.bf16.mxu0 0
    %128 = vmatpush1.bf16.msra.mxu0 0
    %129 = vmatprep.subr.bf16.mxu0 0
    %130 = vmatpush1.bf16.msra.mxu0 0
    %131 = vmatprep.subr.bf16.mxu0 0
    %132 = vmatpush1.bf16.msra.mxu0 0
    %133 = vmatprep.subr.bf16.mxu0 0
    %134 = vmatpush1.bf16.msra.mxu0 0
    %135 = vmatprep.subr.bf16.mxu0 0
    %136 = vmatpush1.bf16.msra.mxu0 0
    %137 = vmatprep.subr.bf16.mxu0 0
    %138 = vmatpush1.bf16.msra.mxu0 0
    %139 = vmatprep.subr.bf16.mxu0 0
    %140 = vmatpush1.bf16.msra.mxu0 0
    %141 = vmatprep.subr.bf16.mxu0 0
    %142 = vmatpush1.bf16.msra.mxu0 0
    %143 = vmatprep.subr.bf16.mxu0 0
    %144 = vmatpush1.bf16.msra.mxu0 0
    %145 = vmatprep.subr.bf16.mxu0 0
    %146 = vmatpush1.bf16.msra.mxu0 0
    %147 = vmatprep.subr.bf16.mxu0 0
    %148 = vmatpush1.bf16.msra.mxu0 0
    %149 = vmatprep.subr.bf16.mxu0 0
    %150 = vmatpush1.bf16.msra.mxu0 0
    %151 = vmatprep.subr.bf16.mxu0 0
    %152 = vmatpush1.bf16.msra.mxu0 0
    %153 = vmatprep.subr.bf16.mxu0 0
    %154 = vmatpush1.bf16.msra.mxu0 0
    %155 = vmatprep.subr.bf16.mxu0 0
    %156 = vmatpush1.bf16.msra.mxu0 0
    %157 = vmatprep.mubr.bf16.mxu0 0
    %158 = vmatmul.mubr.bf16.gmra.mrb[0].mxu0 %v123
    %v159 = vpop.f32.mrb[0].mxu0
    %v160 = vadd.f32 %v88, %v159
    %v161 = vpop.f32.mrb[0].mxu0
    %v162 = vadd.f32 %v92, %v161
    %v163 = vpop.f32.mrb[0].mxu0
    %v164 = vadd.f32 %v88, %v163
    %v165 = vpop.f32.mrb[0].mxu0
    %v166 = vadd.f32 %v92, %v165
    %167 = vdwg.mxu0
    %168 = vmatprep.subr.bf16.mxu0 0
    %169 = vmatpush1.bf16.msra.mxu0 %v117
    %170 = vmatprep.subr.bf16.mxu0 0
    %171 = vmatpush1.bf16.msra.mxu0 0
    %172 = vmatprep.subr.bf16.mxu0 0
    %173 = vmatpush1.bf16.msra.mxu0 0
    %174 = vmatprep.subr.bf16.mxu0 0
    %175 = vmatpush1.bf16.msra.mxu0 0
    %176 = vmatprep.subr.bf16.mxu0 0
    %177 = vmatpush1.bf16.msra.mxu0 0
    %178 = vmatprep.subr.bf16.mxu0 0
    %179 = vmatpush1.bf16.msra.mxu0 0
    %180 = vmatprep.subr.bf16.mxu0 0
    %181 = vmatpush1.bf16.msra.mxu0 0
    %182 = vmatprep.subr.bf16.mxu0 0
    %183 = vmatpush1.bf16.msra.mxu0 0
    %184 = vmatprep.subr.bf16.mxu0 0
    %185 = vmatpush1.bf16.msra.mxu0 0
    %186 = vmatprep.subr.bf16.mxu0 0
    %187 = vmatpush1.bf16.msra.mxu0 0
    %188 = vmatprep.subr.bf16.mxu0 0
    %189 = vmatpush1.bf16.msra.mxu0 0
    %190 = vmatprep.subr.bf16.mxu0 0
    %191 = vmatpush1.bf16.msra.mxu0 0
    %192 = vmatprep.subr.bf16.mxu0 0
    %193 = vmatpush1.bf16.msra.mxu0 0
    %194 = vmatprep.subr.bf16.mxu0 0
    %195 = vmatpush1.bf16.msra.mxu0 0
    %196 = vmatprep.subr.bf16.mxu0 0
    %197 = vmatpush1.bf16.msra.mxu0 0
    %198 = vmatprep.subr.bf16.mxu0 0
    %199 = vmatpush1.bf16.msra.mxu0 0
    %200 = vmatprep.mubr.bf16.mxu0 0
    %201 = vmatmul.mubr.bf16.gmra.mrb[0].mxu0 %v123
    %v202 = vpop.f32.mrb[0].mxu0
    %v203 = vadd.f32 %v96, %v202
    %v204 = vpop.f32.mrb[0].mxu0
    %v205 = vpop.f32.mrb[0].mxu0
    %v206 = vadd.f32 %v96, %v205
    %v207 = vpop.f32.mrb[0].mxu0
    %208 = vdwg.mxu0
    %v209 = vtanh.pop %v160
    %v210 = vtanh.pop %v162
    %v211 = vtanh.pop %v203
    %v212 = vtanh.pop %v164
    %v213 = vtanh.pop %v166
    %v214 = vtanh.pop %v206
    %v215 = vpack.c.bf16 %v212, %v209
    %v216 = vpack.c.bf16 %v213, %v210
    %v217 = vpack.c.bf16 %v214, %v211
    %v218 = vld [vmem:[#allocation7] sm:$0xf]
    %v219 = vld [vmem:[#allocation7 + $0x8] sm:$0xf]
    %v220 = vld [vmem:[#allocation7 + $0x10] sm:$0xf]
    %v221 = vld [vmem:[#allocation7 + $0x18] sm:$0xf]
    %v222 = vld [vmem:[#allocation7 + $0x20] sm:$0xf]
    %v223 = vld [vmem:[#allocation7 + $0x28] sm:$0xf]
    %v224 = vld [vmem:[#allocation7 + $0x30] sm:$0xf]
    %v225 = vld [vmem:[#allocation7 + $0x38] sm:$0xf]
    %v226 = vld [vmem:[#allocation7 + $0x40] sm:$0xf]
    %v227 = vld [vmem:[#allocation7 + $0x48] sm:$0xf]
    %v228 = vld [vmem:[#allocation7 + $0x50] sm:$0xf]
    %v229 = vld [vmem:[#allocation7 + $0x58] sm:$0xf]
    %v230 = vld [vmem:[#allocation7 + $0x60] sm:$0xf]
    %v231 = vld [vmem:[#allocation7 + $0x68] sm:$0xf]
    %v232 = vld [vmem:[#allocation7 + $0x70] sm:$0xf]
    %v233 = vld [vmem:[#allocation7 + $0x78] sm:$0xf]
    %v234 = vld [vmem:[%s4 + $0x3] sm:$0x1]
    %v236 = vlaneseq
    %v237 = vshrl.u32 %v236, 7
    %v238 = vsub.s32 0, %v237
    %v239 = vrot.slane %v234, %v238
    %v257 = vunpack.c.l.b16 %v218
    %v258 = vunpack.c.l.b16 %v219
    %v259 = vunpack.c.l.b16 %v220
    %v260 = vunpack.c.l.b16 %v221
    %v261 = vunpack.c.l.b16 %v222
    %v262 = vunpack.c.l.b16 %v223
    %v263 = vunpack.c.l.b16 %v224
    %v264 = vunpack.c.l.b16 %v225
    %v265 = vunpack.c.l.b16 %v226
    %v266 = vunpack.c.l.b16 %v227
    %v267 = vunpack.c.l.b16 %v228
    %v268 = vunpack.c.l.b16 %v229
    %v269 = vunpack.c.l.b16 %v230
    %v270 = vunpack.c.l.b16 %v231
    %v271 = vunpack.c.l.b16 %v232
    %v272 = vunpack.c.l.b16 %v233
    %v273 = vpack.c.b16 %v258, %v257
    %v274 = vpack.c.b16 %v260, %v259
    %v275 = vpack.c.b16 %v262, %v261
    %v276 = vpack.c.b16 %v264, %v263
    %v277 = vpack.c.b16 %v266, %v265
    %v278 = vpack.c.b16 %v268, %v267
    %v279 = vpack.c.b16 %v270, %v269
    %v280 = vpack.c.b16 %v272, %v271
    %289 = vmatprep.subr.bf16.mxu0 0
    %290 = vmatpush1.bf16.msra.mxu0 %v273
    %291 = vmatprep.subr.bf16.mxu0 0
    %292 = vmatpush1.bf16.msra.mxu0 %v274
    %293 = vmatprep.subr.bf16.mxu0 0
    %294 = vmatpush1.bf16.msra.mxu0 %v275
    %295 = vmatprep.subr.bf16.mxu0 0
    %296 = vmatpush1.bf16.msra.mxu0 %v276
    %297 = vmatprep.subr.bf16.mxu0 0
    %298 = vmatpush1.bf16.msra.mxu0 %v277
    %299 = vmatprep.subr.bf16.mxu0 0
    %300 = vmatpush1.bf16.msra.mxu0 %v278
    %301 = vmatprep.subr.bf16.mxu0 0
    %302 = vmatpush1.bf16.msra.mxu0 %v279
    %303 = vmatprep.subr.bf16.mxu0 0
    %304 = vmatpush1.bf16.msra.mxu0 %v280
    %305 = vmatprep.subr.bf16.mxu0 0
    %306 = vmatpush1.bf16.msra.mxu0 0
    %307 = vmatprep.subr.bf16.mxu0 0
    %308 = vmatpush1.bf16.msra.mxu0 0
    %309 = vmatprep.subr.bf16.mxu0 0
    %310 = vmatpush1.bf16.msra.mxu0 0
    %311 = vmatprep.subr.bf16.mxu0 0
    %312 = vmatpush1.bf16.msra.mxu0 0
    %313 = vmatprep.subr.bf16.mxu0 0
    %314 = vmatpush1.bf16.msra.mxu0 0
    %315 = vmatprep.subr.bf16.mxu0 0
    %316 = vmatpush1.bf16.msra.mxu0 0
    %317 = vmatprep.subr.bf16.mxu0 0
    %318 = vmatpush1.bf16.msra.mxu0 0
    %319 = vmatprep.subr.bf16.mxu0 0
    %320 = vmatpush1.bf16.msra.mxu0 0
    %321 = vmatprep.mubr.bf16.mxu0 0
    %322 = vmatmul.mubr.bf16.gmra.mrb[0].mxu0 %v217
    %v323 = vpop.f32.mrb[0].mxu0
    %v324 = vadd.f32 %v239, %v323
    %v325 = vpop.f32.mrb[0].mxu0
    %v326 = vpop.f32.mrb[0].mxu0
    %v327 = vadd.f32 %v239, %v326
    %v328 = vpop.f32.mrb[0].mxu0
    %329 = vdwg.mxu0
    %v330 = vtanh.pop %v324
    %v331 = vtanh.pop %v327
    %v332 = vpack.c.bf16 %v331, %v330
    %v333 = vld [vmem:[#allocation7 + $0x4] sm:$0xf]
    %v334 = vld [vmem:[#allocation7 + $0xc] sm:$0xf]
    %v335 = vld [vmem:[#allocation7 + $0x14] sm:$0xf]
    %v336 = vld [vmem:[#allocation7 + $0x1c] sm:$0xf]
    %v337 = vld [vmem:[#allocation7 + $0x24] sm:$0xf]
    %v338 = vld [vmem:[#allocation7 + $0x2c] sm:$0xf]
    %v339 = vld [vmem:[#allocation7 + $0x34] sm:$0xf]
    %v340 = vld [vmem:[#allocation7 + $0x3c] sm:$0xf]
    %v341 = vld [vmem:[#allocation7 + $0x44] sm:$0xf]
    %v342 = vld [vmem:[#allocation7 + $0x4c] sm:$0xf]
    %v343 = vld [vmem:[#allocation7 + $0x54] sm:$0xf]
    %v344 = vld [vmem:[#allocation7 + $0x5c] sm:$0xf]
    %v345 = vld [vmem:[#allocation7 + $0x64] sm:$0xf]
    %v346 = vld [vmem:[#allocation7 + $0x6c] sm:$0xf]
    %v347 = vld [vmem:[#allocation7 + $0x74] sm:$0xf]
    %v348 = vld [vmem:[#allocation7 + $0x7c] sm:$0xf]
    %v349 = vld [vmem:[%s4 + $0x4] sm:$0x1]
    %v351 = vlaneseq
    %v352 = vshrl.u32 %v351, 7
    %v353 = vsub.s32 0, %v352
    %v354 = vrot.slane %v349, %v353
    %v372 = vunpack.c.l.b16 %v333
    %v373 = vunpack.c.l.b16 %v334
    %v374 = vunpack.c.l.b16 %v335
    %v375 = vunpack.c.l.b16 %v336
    %v376 = vunpack.c.l.b16 %v337
    %v377 = vunpack.c.l.b16 %v338
    %v378 = vunpack.c.l.b16 %v339
    %v379 = vunpack.c.l.b16 %v340
    %v380 = vunpack.c.l.b16 %v341
    %v381 = vunpack.c.l.b16 %v342
    %v382 = vunpack.c.l.b16 %v343
    %v383 = vunpack.c.l.b16 %v344
    %v384 = vunpack.c.l.b16 %v345
    %v385 = vunpack.c.l.b16 %v346
    %v386 = vunpack.c.l.b16 %v347
    %v387 = vunpack.c.l.b16 %v348
    %v388 = vpack.c.b16 %v373, %v372
    %v389 = vpack.c.b16 %v375, %v374
    %v390 = vpack.c.b16 %v377, %v376
    %v391 = vpack.c.b16 %v379, %v378
    %v392 = vpack.c.b16 %v381, %v380
    %v393 = vpack.c.b16 %v383, %v382
    %v394 = vpack.c.b16 %v385, %v384
    %v395 = vpack.c.b16 %v387, %v386
    %404 = vmatprep.subr.bf16.mxu0 0
    %405 = vmatpush1.bf16.msra.mxu0 %v388
    %406 = vmatprep.subr.bf16.mxu0 0
    %407 = vmatpush1.bf16.msra.mxu0 %v389
    %408 = vmatprep.subr.bf16.mxu0 0
    %409 = vmatpush1.bf16.msra.mxu0 %v390
    %410 = vmatprep.subr.bf16.mxu0 0
    %411 = vmatpush1.bf16.msra.mxu0 %v391
    %412 = vmatprep.subr.bf16.mxu0 0
    %413 = vmatpush1.bf16.msra.mxu0 %v392
    %414 = vmatprep.subr.bf16.mxu0 0
    %415 = vmatpush1.bf16.msra.mxu0 %v393
    %416 = vmatprep.subr.bf16.mxu0 0
    %417 = vmatpush1.bf16.msra.mxu0 %v394
    %418 = vmatprep.subr.bf16.mxu0 0
    %419 = vmatpush1.bf16.msra.mxu0 %v395
    %420 = vmatprep.subr.bf16.mxu0 0
    %421 = vmatpush1.bf16.msra.mxu0 0
    %422 = vmatprep.subr.bf16.mxu0 0
    %423 = vmatpush1.bf16.msra.mxu0 0
    %424 = vmatprep.subr.bf16.mxu0 0
    %425 = vmatpush1.bf16.msra.mxu0 0
    %426 = vmatprep.subr.bf16.mxu0 0
    %427 = vmatpush1.bf16.msra.mxu0 0
    %428 = vmatprep.subr.bf16.mxu0 0
    %429 = vmatpush1.bf16.msra.mxu0 0
    %430 = vmatprep.subr.bf16.mxu0 0
    %431 = vmatpush1.bf16.msra.mxu0 0
    %432 = vmatprep.subr.bf16.mxu0 0
    %433 = vmatpush1.bf16.msra.mxu0 0
    %434 = vmatprep.subr.bf16.mxu0 0
    %435 = vmatpush1.bf16.msra.mxu0 0
    %436 = vmatprep.mubr.bf16.mxu0 0
    %437 = vmatmul.mubr.bf16.gmra.mrb[0].mxu0 %v332
    %v438 = vpop.f32.mrb[0].mxu0
    %v439 = vadd.f32 %v354, %v438
    %v440 = vpop.f32.mrb[0].mxu0
    %v441 = vpop.f32.mrb[0].mxu0
    %v442 = vadd.f32 %v354, %v441
    %v443 = vpop.f32.mrb[0].mxu0
    %444 = vdwg.mxu0
    %v445 = vld [vmem:[#allocation8] sm:$0xff]
    %v446 = vld [vmem:[#allocation8 + $0x14] sm:$0xff]
    %v447 = vld [vmem:[#allocation8 + $0x28] sm:$0xff]
    %v448 = vld [vmem:[#allocation8 + $0x3c] sm:$0xff]
    %v449 = vld [vmem:[#allocation8 + $0x50] sm:$0xff]
    %v450 = vld [vmem:[#allocation8 + $0x64] sm:$0xff]
    %v451 = vld [vmem:[#allocation8 + $0x78] sm:$0xff]
    %v452 = vld [vmem:[#allocation8 + $0x8c] sm:$0xff]
    %v453 = vld [vmem:[#allocation8 + $0xa0] sm:$0xff]
    %v454 = vld [vmem:[#allocation8 + $0xb4] sm:$0xff]
    %v455 = vld [vmem:[#allocation8 + $0xc8] sm:$0xff]
    %v456 = vld [vmem:[#allocation8 + $0xdc] sm:$0xff]
    %v457 = vld [vmem:[#allocation8 + $0xf0] sm:$0xff]
    %v458 = vld [vmem:[#allocation8 + $0x104] sm:$0xff]
    %v459 = vld [vmem:[#allocation8 + $0x118] sm:$0xff]
    %v460 = vld [vmem:[#allocation8 + $0x12c] sm:$0xff]
    %v461 = vld [vmem:[#allocation8 + $0x140] sm:$0xff]
    %v462 = vld [vmem:[#allocation8 + $0x154] sm:$0xff]
    %v463 = vld [vmem:[#allocation8 + $0x168] sm:$0xff]
    %v464 = vld [vmem:[#allocation8 + $0x17c] sm:$0xff]
    %v465 = vld [vmem:[#allocation8 + $0x190] sm:$0xff]
    %v466 = vld [vmem:[#allocation8 + $0x1a4] sm:$0xff]
    %v467 = vld [vmem:[#allocation8 + $0x1b8] sm:$0xff]
    %v468 = vld [vmem:[#allocation8 + $0x1cc] sm:$0xff]
    %v469 = vld [vmem:[#allocation8 + $0x1e0] sm:$0xff]
    %v470 = vld [vmem:[#allocation8 + $0x1f4] sm:$0xff]
    %v471 = vld [vmem:[#allocation8 + $0x208] sm:$0xff]
    %v472 = vld [vmem:[#allocation8 + $0x21c] sm:$0xff]
    %v473 = vld [vmem:[#allocation8 + $0x230] sm:$0xff]
    %v474 = vld [vmem:[#allocation8 + $0x244] sm:$0xff]
    %v475 = vld [vmem:[#allocation8 + $0x258] sm:$0xff]
    %v476 = vld [vmem:[#allocation8 + $0x26c] sm:$0xff]
    %v477 = vld [vmem:[%s4 + $0x5] sm:$0x3]
    %v479 = vlaneseq
    %v480 = vshrl.u32 %v479, 7
    %v481 = vsub.s32 0, %v480
    %v482 = vrot.slane %v477, %v481
    %v483 = vlaneseq
    %v484 = vshrl.u32 %v483, 7
    %v485 = vsub.s32 1, %v484
    %v486 = vrot.slane %v477, %v485
    %v521 = vunpack.c.l.b16 %v445
    %v522 = vunpack.c.h.b16 %v445
    %v523 = vunpack.c.l.b16 %v446
    %v524 = vunpack.c.h.b16 %v446
    %v525 = vunpack.c.l.b16 %v447
    %v526 = vunpack.c.h.b16 %v447
    %v527 = vunpack.c.l.b16 %v448
    %v528 = vunpack.c.h.b16 %v448
    %v529 = vunpack.c.l.b16 %v449
    %v530 = vunpack.c.h.b16 %v449
    %v531 = vunpack.c.l.b16 %v450
    %v532 = vunpack.c.h.b16 %v450
    %v533 = vunpack.c.l.b16 %v451
    %v534 = vunpack.c.h.b16 %v451
    %v535 = vunpack.c.l.b16 %v452
    %v536 = vunpack.c.h.b16 %v452
    %v537 = vunpack.c.l.b16 %v453
    %v538 = vunpack.c.h.b16 %v453
    %v539 = vunpack.c.l.b16 %v454
    %v540 = vunpack.c.h.b16 %v454
    %v541 = vunpack.c.l.b16 %v455
    %v542 = vunpack.c.h.b16 %v455
    %v543 = vunpack.c.l.b16 %v456
    %v544 = vunpack.c.h.b16 %v456
    %v545 = vunpack.c.l.b16 %v457
    %v546 = vunpack.c.h.b16 %v457
    %v547 = vunpack.c.l.b16 %v458
    %v548 = vunpack.c.h.b16 %v458
    %v549 = vunpack.c.l.b16 %v459
    %v550 = vunpack.c.h.b16 %v459
    %v551 = vunpack.c.l.b16 %v460
    %v552 = vunpack.c.h.b16 %v460
    %v553 = vunpack.c.l.b16 %v461
    %v554 = vunpack.c.h.b16 %v461
    %v555 = vunpack.c.l.b16 %v462
    %v556 = vunpack.c.h.b16 %v462
    %v557 = vunpack.c.l.b16 %v463
    %v558 = vunpack.c.h.b16 %v463
    %v559 = vunpack.c.l.b16 %v464
    %v560 = vunpack.c.h.b16 %v464
    %v561 = vunpack.c.l.b16 %v465
    %v562 = vunpack.c.h.b16 %v465
    %v563 = vunpack.c.l.b16 %v466
    %v564 = vunpack.c.h.b16 %v466
    %v565 = vunpack.c.l.b16 %v467
    %v566 = vunpack.c.h.b16 %v467
    %v567 = vunpack.c.l.b16 %v468
    %v568 = vunpack.c.h.b16 %v468
    %v569 = vunpack.c.l.b16 %v469
    %v570 = vunpack.c.h.b16 %v469
    %v571 = vunpack.c.l.b16 %v470
    %v572 = vunpack.c.h.b16 %v470
    %v573 = vunpack.c.l.b16 %v471
    %v574 = vunpack.c.h.b16 %v471
    %v575 = vunpack.c.l.b16 %v472
    %v576 = vunpack.c.h.b16 %v472
    %v577 = vunpack.c.l.b16 %v473
    %v578 = vunpack.c.h.b16 %v473
    %v579 = vunpack.c.l.b16 %v474
    %v580 = vunpack.c.h.b16 %v474
    %v581 = vunpack.c.l.b16 %v475
    %v582 = vunpack.c.h.b16 %v475
    %v583 = vunpack.c.l.b16 %v476
    %v584 = vunpack.c.h.b16 %v476
    %v585 = vpack.c.b16 %v523, %v521
    %v586 = vpack.c.b16 %v524, %v522
    %v587 = vpack.c.b16 %v527, %v525
    %v588 = vpack.c.b16 %v528, %v526
    %v589 = vpack.c.b16 %v531, %v529
    %v590 = vpack.c.b16 %v532, %v530
    %v591 = vpack.c.b16 %v535, %v533
    %v592 = vpack.c.b16 %v536, %v534
    %v593 = vpack.c.b16 %v539, %v537
    %v594 = vpack.c.b16 %v540, %v538
    %v595 = vpack.c.b16 %v543, %v541
    %v596 = vpack.c.b16 %v544, %v542
    %v597 = vpack.c.b16 %v547, %v545
    %v598 = vpack.c.b16 %v548, %v546
    %v599 = vpack.c.b16 %v551, %v549
    %v600 = vpack.c.b16 %v552, %v550
    %v601 = vpack.c.b16 %v555, %v553
    %v602 = vpack.c.b16 %v556, %v554
    %v603 = vpack.c.b16 %v559, %v557
    %v604 = vpack.c.b16 %v560, %v558
    %v605 = vpack.c.b16 %v563, %v561
    %v606 = vpack.c.b16 %v564, %v562
    %v607 = vpack.c.b16 %v567, %v565
    %v608 = vpack.c.b16 %v568, %v566
    %v609 = vpack.c.b16 %v571, %v569
    %v610 = vpack.c.b16 %v572, %v570
    %v611 = vpack.c.b16 %v575, %v573
    %v612 = vpack.c.b16 %v576, %v574
    %v613 = vpack.c.b16 %v579, %v577
    %v614 = vpack.c.b16 %v580, %v578
    %v615 = vpack.c.b16 %v583, %v581
    %v616 = vpack.c.b16 %v584, %v582
    %649 = vmatprep.subr.bf16.mxu0 %v586
    %650 = vmatpush1.bf16.msra.mxu0 %v585
    %651 = vmatprep.subr.bf16.mxu0 %v588
    %652 = vmatpush1.bf16.msra.mxu0 %v587
    %653 = vmatprep.subr.bf16.mxu0 %v590
    %654 = vmatpush1.bf16.msra.mxu0 %v589
    %655 = vmatprep.subr.bf16.mxu0 %v592
    %656 = vmatpush1.bf16.msra.mxu0 %v591
    %657 = vmatprep.subr.bf16.mxu0 %v594
    %658 = vmatpush1.bf16.msra.mxu0 %v593
    %659 = vmatprep.subr.bf16.mxu0 %v596
    %660 = vmatpush1.bf16.msra.mxu0 %v595
    %661 = vmatprep.subr.bf16.mxu0 %v598
    %662 = vmatpush1.bf16.msra.mxu0 %v597
    %663 = vmatprep.subr.bf16.mxu0 %v600
    %664 = vmatpush1.bf16.msra.mxu0 %v599
    %665 = vmatprep.subr.bf16.mxu0 %v602
    %666 = vmatpush1.bf16.msra.mxu0 %v601
    %667 = vmatprep.subr.bf16.mxu0 %v604
    %668 = vmatpush1.bf16.msra.mxu0 %v603
    %669 = vmatprep.subr.bf16.mxu0 %v606
    %670 = vmatpush1.bf16.msra.mxu0 %v605
    %671 = vmatprep.subr.bf16.mxu0 %v608
    %672 = vmatpush1.bf16.msra.mxu0 %v607
    %673 = vmatprep.subr.bf16.mxu0 %v610
    %674 = vmatpush1.bf16.msra.mxu0 %v609
    %675 = vmatprep.subr.bf16.mxu0 %v612
    %676 = vmatpush1.bf16.msra.mxu0 %v611
    %677 = vmatprep.subr.bf16.mxu0 %v614
    %678 = vmatpush1.bf16.msra.mxu0 %v613
    %679 = vmatprep.subr.bf16.mxu0 %v616
    %680 = vmatpush1.bf16.msra.mxu0 %v615
    %681 = vmatprep.mubr.bf16.mxu0 %v216
    %682 = vmatmul.mubr.bf16.gmra.mrb[0].mxu0 %v215
    %v683 = vpop.f32.mrb[0].mxu0
    %v684 = vadd.f32 %v482, %v683
    %v685 = vpop.f32.mrb[0].mxu0
    %v686 = vadd.f32 %v486, %v685
    %v687 = vpop.f32.mrb[0].mxu0
    %v688 = vadd.f32 %v482, %v687
    %v689 = vpop.f32.mrb[0].mxu0
    %v690 = vadd.f32 %v486, %v689
    %691 = vdwg.mxu0
    %v692 = vtanh.pop %v684
    %v693 = vtanh.pop %v686
    %v694 = vtanh.pop %v688
    %v695 = vtanh.pop %v690
    %v696 = vpack.c.bf16 %v694, %v692
    %v697 = vpack.c.bf16 %v695, %v693
    %v698 = vld [vmem:[#allocation8 + $0x8] sm:$0xff]
    %v699 = vld [vmem:[#allocation8 + $0x1c] sm:$0xff]
    %v700 = vld [vmem:[#allocation8 + $0x30] sm:$0xff]
    %v701 = vld [vmem:[#allocation8 + $0x44] sm:$0xff]
    %v702 = vld [vmem:[#allocation8 + $0x58] sm:$0xff]
    %v703 = vld [vmem:[#allocation8 + $0x6c] sm:$0xff]
    %v704 = vld [vmem:[#allocation8 + $0x80] sm:$0xff]
    %v705 = vld [vmem:[#allocation8 + $0x94] sm:$0xff]
    %v706 = vld [vmem:[#allocation8 + $0xa8] sm:$0xff]
    %v707 = vld [vmem:[#allocation8 + $0xbc] sm:$0xff]
    %v708 = vld [vmem:[#allocation8 + $0xd0] sm:$0xff]
    %v709 = vld [vmem:[#allocation8 + $0xe4] sm:$0xff]
    %v710 = vld [vmem:[#allocation8 + $0xf8] sm:$0xff]
    %v711 = vld [vmem:[#allocation8 + $0x10c] sm:$0xff]
    %v712 = vld [vmem:[#allocation8 + $0x120] sm:$0xff]
    %v713 = vld [vmem:[#allocation8 + $0x134] sm:$0xff]
    %v714 = vld [vmem:[#allocation8 + $0x148] sm:$0xff]
    %v715 = vld [vmem:[#allocation8 + $0x15c] sm:$0xff]
    %v716 = vld [vmem:[#allocation8 + $0x170] sm:$0xff]
    %v717 = vld [vmem:[#allocation8 + $0x184] sm:$0xff]
    %v718 = vld [vmem:[#allocation8 + $0x198] sm:$0xff]
    %v719 = vld [vmem:[#allocation8 + $0x1ac] sm:$0xff]
    %v720 = vld [vmem:[#allocation8 + $0x1c0] sm:$0xff]
    %v721 = vld [vmem:[#allocation8 + $0x1d4] sm:$0xff]
    %v722 = vld [vmem:[#allocation8 + $0x1e8] sm:$0xff]
    %v723 = vld [vmem:[#allocation8 + $0x1fc] sm:$0xff]
    %v724 = vld [vmem:[#allocation8 + $0x210] sm:$0xff]
    %v725 = vld [vmem:[#allocation8 + $0x224] sm:$0xff]
    %v726 = vld [vmem:[#allocation8 + $0x238] sm:$0xff]
    %v727 = vld [vmem:[#allocation8 + $0x24c] sm:$0xff]
    %v728 = vld [vmem:[#allocation8 + $0x260] sm:$0xff]
    %v729 = vld [vmem:[#allocation8 + $0x274] sm:$0xff]
    %v730 = vld [vmem:[%s4 + $0x7] sm:$0x3]
    %v732 = vlaneseq
    %v733 = vshrl.u32 %v732, 7
    %v734 = vsub.s32 0, %v733
    %v735 = vrot.slane %v730, %v734
    %v736 = vlaneseq
    %v737 = vshrl.u32 %v736, 7
    %v738 = vsub.s32 1, %v737
    %v739 = vrot.slane %v730, %v738
    %v774 = vunpack.c.l.b16 %v698
    %v775 = vunpack.c.h.b16 %v698
    %v776 = vunpack.c.l.b16 %v699
    %v777 = vunpack.c.h.b16 %v699
    %v778 = vunpack.c.l.b16 %v700
    %v779 = vunpack.c.h.b16 %v700
    %v780 = vunpack.c.l.b16 %v701
    %v781 = vunpack.c.h.b16 %v701
    %v782 = vunpack.c.l.b16 %v702
    %v783 = vunpack.c.h.b16 %v702
    %v784 = vunpack.c.l.b16 %v703
    %v785 = vunpack.c.h.b16 %v703
    %v786 = vunpack.c.l.b16 %v704
    %v787 = vunpack.c.h.b16 %v704
    %v788 = vunpack.c.l.b16 %v705
    %v789 = vunpack.c.h.b16 %v705
    %v790 = vunpack.c.l.b16 %v706
    %v791 = vunpack.c.h.b16 %v706
    %v792 = vunpack.c.l.b16 %v707
    %v793 = vunpack.c.h.b16 %v707
    %v794 = vunpack.c.l.b16 %v708
    %v795 = vunpack.c.h.b16 %v708
    %v796 = vunpack.c.l.b16 %v709
    %v797 = vunpack.c.h.b16 %v709
    %v798 = vunpack.c.l.b16 %v710
    %v799 = vunpack.c.h.b16 %v710
    %v800 = vunpack.c.l.b16 %v711
    %v801 = vunpack.c.h.b16 %v711
    %v802 = vunpack.c.l.b16 %v712
    %v803 = vunpack.c.h.b16 %v712
    %v804 = vunpack.c.l.b16 %v713
    %v805 = vunpack.c.h.b16 %v713
    %v806 = vunpack.c.l.b16 %v714
    %v807 = vunpack.c.h.b16 %v714
    %v808 = vunpack.c.l.b16 %v715
    %v809 = vunpack.c.h.b16 %v715
    %v810 = vunpack.c.l.b16 %v716
    %v811 = vunpack.c.h.b16 %v716
    %v812 = vunpack.c.l.b16 %v717
    %v813 = vunpack.c.h.b16 %v717
    %v814 = vunpack.c.l.b16 %v718
    %v815 = vunpack.c.h.b16 %v718
    %v816 = vunpack.c.l.b16 %v719
    %v817 = vunpack.c.h.b16 %v719
    %v818 = vunpack.c.l.b16 %v720
    %v819 = vunpack.c.h.b16 %v720
    %v820 = vunpack.c.l.b16 %v721
    %v821 = vunpack.c.h.b16 %v721
    %v822 = vunpack.c.l.b16 %v722
    %v823 = vunpack.c.h.b16 %v722
    %v824 = vunpack.c.l.b16 %v723
    %v825 = vunpack.c.h.b16 %v723
    %v826 = vunpack.c.l.b16 %v724
    %v827 = vunpack.c.h.b16 %v724
    %v828 = vunpack.c.l.b16 %v725
    %v829 = vunpack.c.h.b16 %v725
    %v830 = vunpack.c.l.b16 %v726
    %v831 = vunpack.c.h.b16 %v726
    %v832 = vunpack.c.l.b16 %v727
    %v833 = vunpack.c.h.b16 %v727
    %v834 = vunpack.c.l.b16 %v728
    %v835 = vunpack.c.h.b16 %v728
    %v836 = vunpack.c.l.b16 %v729
    %v837 = vunpack.c.h.b16 %v729
    %v838 = vpack.c.b16 %v776, %v774
    %v839 = vpack.c.b16 %v777, %v775
    %v840 = vpack.c.b16 %v780, %v778
    %v841 = vpack.c.b16 %v781, %v779
    %v842 = vpack.c.b16 %v784, %v782
    %v843 = vpack.c.b16 %v785, %v783
    %v844 = vpack.c.b16 %v788, %v786
    %v845 = vpack.c.b16 %v789, %v787
    %v846 = vpack.c.b16 %v792, %v790
    %v847 = vpack.c.b16 %v793, %v791
    %v848 = vpack.c.b16 %v796, %v794
    %v849 = vpack.c.b16 %v797, %v795
    %v850 = vpack.c.b16 %v800, %v798
    %v851 = vpack.c.b16 %v801, %v799
    %v852 = vpack.c.b16 %v804, %v802
    %v853 = vpack.c.b16 %v805, %v803
    %v854 = vpack.c.b16 %v808, %v806
    %v855 = vpack.c.b16 %v809, %v807
    %v856 = vpack.c.b16 %v812, %v810
    %v857 = vpack.c.b16 %v813, %v811
    %v858 = vpack.c.b16 %v816, %v814
    %v859 = vpack.c.b16 %v817, %v815
    %v860 = vpack.c.b16 %v820, %v818
    %v861 = vpack.c.b16 %v821, %v819
    %v862 = vpack.c.b16 %v824, %v822
    %v863 = vpack.c.b16 %v825, %v823
    %v864 = vpack.c.b16 %v828, %v826
    %v865 = vpack.c.b16 %v829, %v827
    %v866 = vpack.c.b16 %v832, %v830
    %v867 = vpack.c.b16 %v833, %v831
    %v868 = vpack.c.b16 %v836, %v834
    %v869 = vpack.c.b16 %v837, %v835
    %902 = vmatprep.subr.bf16.mxu0 %v839
    %903 = vmatpush1.bf16.msra.mxu0 %v838
    %904 = vmatprep.subr.bf16.mxu0 %v841
    %905 = vmatpush1.bf16.msra.mxu0 %v840
    %906 = vmatprep.subr.bf16.mxu0 %v843
    %907 = vmatpush1.bf16.msra.mxu0 %v842
    %908 = vmatprep.subr.bf16.mxu0 %v845
    %909 = vmatpush1.bf16.msra.mxu0 %v844
    %910 = vmatprep.subr.bf16.mxu0 %v847
    %911 = vmatpush1.bf16.msra.mxu0 %v846
    %912 = vmatprep.subr.bf16.mxu0 %v849
    %913 = vmatpush1.bf16.msra.mxu0 %v848
    %914 = vmatprep.subr.bf16.mxu0 %v851
    %915 = vmatpush1.bf16.msra.mxu0 %v850
    %916 = vmatprep.subr.bf16.mxu0 %v853
    %917 = vmatpush1.bf16.msra.mxu0 %v852
    %918 = vmatprep.subr.bf16.mxu0 %v855
    %919 = vmatpush1.bf16.msra.mxu0 %v854
    %920 = vmatprep.subr.bf16.mxu0 %v857
    %921 = vmatpush1.bf16.msra.mxu0 %v856
    %922 = vmatprep.subr.bf16.mxu0 %v859
    %923 = vmatpush1.bf16.msra.mxu0 %v858
    %924 = vmatprep.subr.bf16.mxu0 %v861
    %925 = vmatpush1.bf16.msra.mxu0 %v860
    %926 = vmatprep.subr.bf16.mxu0 %v863
    %927 = vmatpush1.bf16.msra.mxu0 %v862
    %928 = vmatprep.subr.bf16.mxu0 %v865
    %929 = vmatpush1.bf16.msra.mxu0 %v864
    %930 = vmatprep.subr.bf16.mxu0 %v867
    %931 = vmatpush1.bf16.msra.mxu0 %v866
    %932 = vmatprep.subr.bf16.mxu0 %v869
    %933 = vmatpush1.bf16.msra.mxu0 %v868
    %934 = vmatprep.mubr.bf16.mxu0 %v697
    %935 = vmatmul.mubr.bf16.gmra.mrb[0].mxu0 %v696
    %v936 = vpop.f32.mrb[0].mxu0
    %v937 = vadd.f32 %v735, %v936
    %v938 = vpop.f32.mrb[0].mxu0
    %v939 = vadd.f32 %v739, %v938
    %v940 = vpop.f32.mrb[0].mxu0
    %v941 = vadd.f32 %v735, %v940
    %v942 = vpop.f32.mrb[0].mxu0
    %v943 = vadd.f32 %v739, %v942
    %944 = vdwg.mxu0
    %v945 = vtanh.pop %v937
    %v946 = vtanh.pop %v939
    %v947 = vtanh.pop %v941
    %v948 = vtanh.pop %v943
    %v949 = vpack.c.bf16 %v947, %v945
    %v950 = vpack.c.bf16 %v948, %v946
    %v951 = vld [vmem:[#allocation8 + $0x10] sm:$0xf]
    %v952 = vld [vmem:[#allocation8 + $0x24] sm:$0xf]
    %v953 = vld [vmem:[#allocation8 + $0x38] sm:$0xf]
    %v954 = vld [vmem:[#allocation8 + $0x4c] sm:$0xf]
    %v955 = vld [vmem:[#allocation8 + $0x60] sm:$0xf]
    %v956 = vld [vmem:[#allocation8 + $0x74] sm:$0xf]
    %v957 = vld [vmem:[#allocation8 + $0x88] sm:$0xf]
    %v958 = vld [vmem:[#allocation8 + $0x9c] sm:$0xf]
    %v959 = vld [vmem:[#allocation8 + $0xb0] sm:$0xf]
    %v960 = vld [vmem:[#allocation8 + $0xc4] sm:$0xf]
    %v961 = vld [vmem:[#allocation8 + $0xd8] sm:$0xf]
    %v962 = vld [vmem:[#allocation8 + $0xec] sm:$0xf]
    %v963 = vld [vmem:[#allocation8 + $0x100] sm:$0xf]
    %v964 = vld [vmem:[#allocation8 + $0x114] sm:$0xf]
    %v965 = vld [vmem:[#allocation8 + $0x128] sm:$0xf]
    %v966 = vld [vmem:[#allocation8 + $0x13c] sm:$0xf]
    %v967 = vld [vmem:[#allocation8 + $0x150] sm:$0xf]
    %v968 = vld [vmem:[#allocation8 + $0x164] sm:$0xf]
    %v969 = vld [vmem:[#allocation8 + $0x178] sm:$0xf]
    %v970 = vld [vmem:[#allocation8 + $0x18c] sm:$0xf]
    %v971 = vld [vmem:[#allocation8 + $0x1a0] sm:$0xf]
    %v972 = vld [vmem:[#allocation8 + $0x1b4] sm:$0xf]
    %v973 = vld [vmem:[#allocation8 + $0x1c8] sm:$0xf]
    %v974 = vld [vmem:[#allocation8 + $0x1dc] sm:$0xf]
    %v975 = vld [vmem:[#allocation8 + $0x1f0] sm:$0xf]
    %v976 = vld [vmem:[#allocation8 + $0x204] sm:$0xf]
    %v977 = vld [vmem:[#allocation8 + $0x218] sm:$0xf]
    %v978 = vld [vmem:[#allocation8 + $0x22c] sm:$0xf]
    %v979 = vld [vmem:[#allocation8 + $0x240] sm:$0xf]
    %v980 = vld [vmem:[#allocation8 + $0x254] sm:$0xf]
    %v981 = vld [vmem:[#allocation8 + $0x268] sm:$0xf]
    %v982 = vld [vmem:[#allocation8 + $0x27c] sm:$0xf]
    %v983 = vld [vmem:[%s4 + $0x9] sm:$0x1]
    %v985 = vlaneseq
    %v986 = vshrl.u32 %v985, 7
    %v987 = vsub.s32 0, %v986
    %v988 = vrot.slane %v983, %v987
    %v1022 = vunpack.c.l.b16 %v951
    %v1023 = vunpack.c.l.b16 %v952
    %v1024 = vunpack.c.l.b16 %v953
    %v1025 = vunpack.c.l.b16 %v954
    %v1026 = vunpack.c.l.b16 %v955
    %v1027 = vunpack.c.l.b16 %v956
    %v1028 = vunpack.c.l.b16 %v957
    %v1029 = vunpack.c.l.b16 %v958
    %v1030 = vunpack.c.l.b16 %v959
    %v1031 = vunpack.c.l.b16 %v960
    %v1032 = vunpack.c.l.b16 %v961
    %v1033 = vunpack.c.l.b16 %v962
    %v1034 = vunpack.c.l.b16 %v963
    %v1035 = vunpack.c.l.b16 %v964
    %v1036 = vunpack.c.l.b16 %v965
    %v1037 = vunpack.c.l.b16 %v966
    %v1038 = vunpack.c.l.b16 %v967
    %v1039 = vunpack.c.l.b16 %v968
    %v1040 = vunpack.c.l.b16 %v969
    %v1041 = vunpack.c.l.b16 %v970
    %v1042 = vunpack.c.l.b16 %v971
    %v1043 = vunpack.c.l.b16 %v972
    %v1044 = vunpack.c.l.b16 %v973
    %v1045 = vunpack.c.l.b16 %v974
    %v1046 = vunpack.c.l.b16 %v975
    %v1047 = vunpack.c.l.b16 %v976
    %v1048 = vunpack.c.l.b16 %v977
    %v1049 = vunpack.c.l.b16 %v978
    %v1050 = vunpack.c.l.b16 %v979
    %v1051 = vunpack.c.l.b16 %v980
    %v1052 = vunpack.c.l.b16 %v981
    %v1053 = vunpack.c.l.b16 %v982
    %v1054 = vpack.c.b16 %v1023, %v1022
    %v1055 = vpack.c.b16 %v1025, %v1024
    %v1056 = vpack.c.b16 %v1027, %v1026
    %v1057 = vpack.c.b16 %v1029, %v1028
    %v1058 = vpack.c.b16 %v1031, %v1030
    %v1059 = vpack.c.b16 %v1033, %v1032
    %v1060 = vpack.c.b16 %v1035, %v1034
    %v1061 = vpack.c.b16 %v1037, %v1036
    %v1062 = vpack.c.b16 %v1039, %v1038
    %v1063 = vpack.c.b16 %v1041, %v1040
    %v1064 = vpack.c.b16 %v1043, %v1042
    %v1065 = vpack.c.b16 %v1045, %v1044
    %v1066 = vpack.c.b16 %v1047, %v1046
    %v1067 = vpack.c.b16 %v1049, %v1048
    %v1068 = vpack.c.b16 %v1051, %v1050
    %v1069 = vpack.c.b16 %v1053, %v1052
    %1086 = vmatprep.subr.bf16.mxu0 0
    %1087 = vmatpush1.bf16.msra.mxu0 %v1054
    %1088 = vmatprep.subr.bf16.mxu0 0
    %1089 = vmatpush1.bf16.msra.mxu0 %v1055
    %1090 = vmatprep.subr.bf16.mxu0 0
    %1091 = vmatpush1.bf16.msra.mxu0 %v1056
    %1092 = vmatprep.subr.bf16.mxu0 0
    %1093 = vmatpush1.bf16.msra.mxu0 %v1057
    %1094 = vmatprep.subr.bf16.mxu0 0
    %1095 = vmatpush1.bf16.msra.mxu0 %v1058
    %1096 = vmatprep.subr.bf16.mxu0 0
    %1097 = vmatpush1.bf16.msra.mxu0 %v1059
    %1098 = vmatprep.subr.bf16.mxu0 0
    %1099 = vmatpush1.bf16.msra.mxu0 %v1060
    %1100 = vmatprep.subr.bf16.mxu0 0
    %1101 = vmatpush1.bf16.msra.mxu0 %v1061
    %1102 = vmatprep.subr.bf16.mxu0 0
    %1103 = vmatpush1.bf16.msra.mxu0 %v1062
    %1104 = vmatprep.subr.bf16.mxu0 0
    %1105 = vmatpush1.bf16.msra.mxu0 %v1063
    %1106 = vmatprep.subr.bf16.mxu0 0
    %1107 = vmatpush1.bf16.msra.mxu0 %v1064
    %1108 = vmatprep.subr.bf16.mxu0 0
    %1109 = vmatpush1.bf16.msra.mxu0 %v1065
    %1110 = vmatprep.subr.bf16.mxu0 0
    %1111 = vmatpush1.bf16.msra.mxu0 %v1066
    %1112 = vmatprep.subr.bf16.mxu0 0
    %1113 = vmatpush1.bf16.msra.mxu0 %v1067
    %1114 = vmatprep.subr.bf16.mxu0 0
    %1115 = vmatpush1.bf16.msra.mxu0 %v1068
    %1116 = vmatprep.subr.bf16.mxu0 0
    %1117 = vmatpush1.bf16.msra.mxu0 %v1069
    %1118 = vmatprep.mubr.bf16.mxu0 %v950
    %1119 = vmatmul.mubr.bf16.gmra.mrb[0].mxu0 %v949
    %v1120 = vpop.f32.mrb[0].mxu0
    %v1121 = vadd.f32 %v988, %v1120
    %v1122 = vpop.f32.mrb[0].mxu0
    %v1123 = vpop.f32.mrb[0].mxu0
    %v1124 = vadd.f32 %v988, %v1123
    %v1125 = vpop.f32.mrb[0].mxu0
    %1126 = vdwg.mxu0
    %1127 = vst [vmem:[#allocation10] sm:$0xff] %v439
    %1128 = vst [vmem:[#allocation10 + $0x10] sm:$0xff] %v442
    %1129 = vst [vmem:[#allocation10 + $0x8] sm:$0xff] %v1121
    %1130 = vst [vmem:[#allocation10 + $0x18] sm:$0xff] %v1124
    // Predicated region
    $region38: #{tpu_custom_call.1} parent=1 // pred_check
      _
    $region39: #{tpu_custom_call.1} parent=1 // pred_check_branch
      %1132 = sbr.rel (0) target = $region41
    $region40: #{tpu_custom_call.1} parent=1 // pred_region
      %s1134 = ssub.s32 512, 512
      %1135 = vsyncadd [#allocation4], %s1134
      %s1136 = sshll.u32 [#allocation10], 4
      %s1137 = int_to_ptr.vmem [resolvable:$true] %s1136
      %1142 = dma.vmem_to_hbm [thread:$0]  %s1137, 512, %s5, [#allocation4], 256, 256, 16
    $region41: #{tpu_custom_call.1} parent=1 // pred_fallthru
      _
    // Predicated region
    $region42: #{tpu_custom_call.1} parent=1 // pred_check
      _
    $region43: #{tpu_custom_call.1} parent=1 // pred_check_branch
      %1144 = sbr.rel (0) target = $region45
    $region44: #{tpu_custom_call.1} parent=1 // pred_region
      %1145 = dma.done [#allocation4], 512
    $region45: #{tpu_custom_call.1} parent=1 // pred_fallthru
      _
    %1146 = vsyncpa [#allocation3], 1
    %1147 = vsyncpa [#allocation6], 1
    %1148 = vsyncpa [#allocation9], 1
    %1149 = vsyncpa [#allocation4], 1

</llo_original>
